<compile_context>
chip_gen: v7x
topology: tpu7x:2x2x1
jax: 0.10.0
libtpu: 0.0.40
codegen_flags: <defaults>
</compile_context>

<pallas_src>
import functools

import jax
import jax.numpy as jnp
from jax.experimental import pallas as pl
from jax.experimental.pallas import tpu as pltpu

# Conv geometry of the module (fixed by the PyTorch __init__).
K1, S1, P1 = 5, 2, 2        # act_fea_cv1: kernel=5, stride=2, pad=2 (circular)
K2, S2, P2 = 3, 2, 1        # act_fea_cv2: kernel=3, stride=2, pad=1 (circular)
C_HID = 32                  # conv channels
FC1_OUT = 64


# ----------------------------------------------------------------------------
# Fused Pallas kernel: conv1 + ReLU -> conv2 + ReLU -> fc1 + ReLU -> fc2
# ----------------------------------------------------------------------------
def _fused_kernel(x_ref, nl_ref, w1_ref, b1_ref, w2_ref, b2_ref,
                  fc1c_ref, fc1n_ref, fc1b_ref, fc2_ref, fc2b_ref, o_ref,
                  *, L, Cin, L1, L2):
    x = x_ref[...]            # (tn, L*Cin)  channel-last flattened lidar rows
    w1 = w1_ref[...]          # (K1*Cin, 32) row = kk*Cin + ci
    b1 = b1_ref[...]          # (1, 32)

    # --- conv1 (circular pad, stride 2) + ReLU: per-tap VPU FMAs -------------
    # Circular padding == static modular index arithmetic; taps are static
    # lane slices of the VMEM-resident input, so nothing touches HBM.
    h1 = []
    for t in range(L1):
        acc = b1
        for kk in range(K1):
            src = (t * S1 + kk - P1) % L            # exact circular index
            for ci in range(Cin):
                col = src * Cin + ci
                row = kk * Cin + ci
                acc = acc + x[:, col:col + 1] * w1[row:row + 1, :]   # (tn,32)
        h1.append(jnp.maximum(acc, 0.0))            # stays in vregs / VMEM

    # --- conv2 (circular pad, stride 2) + ReLU, fused with fc1 ---------------
    # h2 is never flattened/transposed: fc1's weight was pre-split per conv2
    # output position with PyTorch's channel-major ordering folded in.
    w2 = w2_ref[...]                                # (K2*32, 32) taps on rows
    b2 = b2_ref[...]                                # (1, 32)
    acc1 = jnp.dot(nl_ref[...], fc1n_ref[...],
                   preferred_element_type=jnp.float32) + fc1b_ref[...]  # (tn,64)
    for t in range(L2):
        taps = [h1[(t * S2 + kk - P2) % L1] for kk in range(K2)]
        p = jnp.concatenate(taps, axis=-1)          # (tn, 96) lane concat
        h2t = jnp.maximum(
            jnp.dot(p, w2, preferred_element_type=jnp.float32) + b2, 0.0)
        acc1 = acc1 + jnp.dot(h2t, fc1c_ref[t],
                              preferred_element_type=jnp.float32)        # (tn,64)

    # --- fc1 ReLU + fc2 -------------------------------------------------------
    f1 = jnp.maximum(acc1, 0.0)
    out = jnp.dot(f1, fc2_ref[...],
                  preferred_element_type=jnp.float32) + fc2b_ref[...]
    o_ref[...] = out.astype(o_ref.dtype)


def _pick_tile_n(n_rows):
    # Prefer >=2 sublane-aligned (multiple-of-8) row tiles so the "parallel"
    # grid axis can be split across v7x's two TensorCores; otherwise one block.
    for t in (1024, 512, 256, 128, 64, 32, 16, 8):
        if n_rows % t == 0 and n_rows // t >= 2:
            return t
    return n_rows


# ----------------------------------------------------------------------------
# Parameter init (canonical PyTorch layout) + one-time kernel re-layout
# ----------------------------------------------------------------------------
def init_params(key, num_lidar, num_non_lidar, nframes=1, output_dim=32):
    L1 = (num_lidar + 2 * P1 - K1) // S1 + 1
    L2 = (L1 + 2 * P2 - K2) // S2 + 1
    fc1_in = C_HID * L2 + num_non_lidar * nframes
    ks = jax.random.split(key, 8)

    def u(k, shape, scale):
        return jax.random.uniform(k, shape, jnp.float32, -scale, scale)

    return {
        "w1": u(ks[0], (C_HID, nframes, K1), 0.3),     # Conv1d (Cout, Cin, K)
        "b1": u(ks[1], (C_HID,), 0.1),
        "w2": u(ks[2], (C_HID, C_HID, K2), 0.1),
        "b2": u(ks[3], (C_HID,), 0.1),
        "fc1_w": u(ks[4], (FC1_OUT, fc1_in), (6.0 / (FC1_OUT + fc1_in)) ** 0.5),
        "fc1_b": u(ks[5], (FC1_OUT,), 0.05),
        "fc2_w": u(ks[6], (output_dim, FC1_OUT), (6.0 / (FC1_OUT + output_dim)) ** 0.5),
        "fc2_b": u(ks[7], (output_dim,), 0.05),
    }


def prepare_params(params, num_lidar_features):
    """One-time re-layout of the canonical weights into kernel format."""
    L = num_lidar_features
    nframes = params["w1"].shape[1]
    L1 = (L + 2 * P1 - K1) // S1 + 1
    L2 = (L1 + 2 * P2 - K2) // S2 + 1
    conv_feat = C_HID * L2
    fc1_w = params["fc1_w"]
    out_dim = params["fc2_w"].shape[0]
    return {
        # conv weights as (tap*Cin, Cout): row kk*Cin + ci  holds  w[:, ci, kk]
        "w1k": jnp.transpose(params["w1"], (2, 1, 0)).reshape(K1 * nframes, C_HID),
        "b1": params["b1"].reshape(1, C_HID),
        "w2k": jnp.transpose(params["w2"], (2, 1, 0)).reshape(K2 * C_HID, C_HID),
        "b2": params["b2"].reshape(1, C_HID),
        # fc1 split: conv part per conv2 output position t, channel-major
        # PyTorch flatten (column c*L2 + t) folded in -> (L2, 32, 64).
        "fc1c": jnp.transpose(fc1_w[:, :conv_feat].reshape(FC1_OUT, C_HID, L2),
                              (2, 1, 0)),
        "fc1n": fc1_w[:, conv_feat:].T,              # (NLf, 64)
        "fc1b": params["fc1_b"].reshape(1, FC1_OUT),
        "fc2k": params["fc2_w"].T,                   # (64, out_dim)
        "fc2b": params["fc2_b"].reshape(1, out_dim),
    }


# ----------------------------------------------------------------------------
# Forward wrapper (single pallas_call)
# ----------------------------------------------------------------------------
def cnn_model_forward(kp, lidar, non_lidar):
    b0 = lidar.shape[0]
    if lidar.ndim == 4:                               # 'b n c l -> (b n) c l'
        x = lidar.reshape(-1, lidar.shape[-2], lidar.shape[-1])
    else:
        x = lidar
    N, Cin, L = x.shape
    L1 = (L + 2 * P1 - K1) // S1 + 1
    L2 = (L1 + 2 * P2 - K2) // S2 + 1
    Dout = kp["fc2b"].shape[-1]

    # Channel-last, flattened (column = l*Cin + ci). For nframes==1 this is a
    # pure reshape (no data movement); in general a tiny boundary transpose.
    x2 = jnp.swapaxes(x, 1, 2).reshape(N, L * Cin)
    nl = non_lidar.reshape(-1, non_lidar.shape[-1] * non_lidar.shape[-2])
    nl = nl.astype(x2.dtype)
    NLf = nl.shape[-1]

    tile_n = _pick_tile_n(N)
    grid = (N // tile_n,)

    kernel = functools.partial(_fused_kernel, L=L, Cin=Cin, L1=L1, L2=L2)

    flops = 2 * N * (L1 * K1 * Cin * C_HID + L2 * K2 * C_HID * C_HID
                     + L2 * C_HID * FC1_OUT + NLf * FC1_OUT + FC1_OUT * Dout)
    bytes_accessed = 4 * (x2.size + nl.size + N * Dout
                          + sum(int(v.size) for v in kp.values()))

    out = pl.pallas_call(
        kernel,
        out_shape=jax.ShapeDtypeStruct((N, Dout), x2.dtype),
        grid=grid,
        in_specs=[
            pl.BlockSpec((tile_n, L * Cin), lambda i: (i, 0)),
            pl.BlockSpec((tile_n, NLf), lambda i: (i, 0)),
            pl.BlockSpec(kp["w1k"].shape, lambda i: (0, 0)),
            pl.BlockSpec(kp["b1"].shape, lambda i: (0, 0)),
            pl.BlockSpec(kp["w2k"].shape, lambda i: (0, 0)),
            pl.BlockSpec(kp["b2"].shape, lambda i: (0, 0)),
            pl.BlockSpec(kp["fc1c"].shape, lambda i: (0, 0, 0)),
            pl.BlockSpec(kp["fc1n"].shape, lambda i: (0, 0)),
            pl.BlockSpec(kp["fc1b"].shape, lambda i: (0, 0)),
            pl.BlockSpec(kp["fc2k"].shape, lambda i: (0, 0)),
            pl.BlockSpec(kp["fc2b"].shape, lambda i: (0, 0)),
        ],
        out_specs=pl.BlockSpec((tile_n, Dout), lambda i: (i, 0)),
        compiler_params=pltpu.CompilerParams(
            dimension_semantics=("parallel",),
            vmem_limit_bytes=32 * 1024 * 1024),
        cost_estimate=pl.CostEstimate(flops=flops, transcendentals=0,
                                      bytes_accessed=bytes_accessed),
    )(x2, nl, kp["w1k"], kp["b1"], kp["w2k"], kp["b2"],
      kp["fc1c"], kp["fc1n"], kp["fc1b"], kp["fc2k"], kp["fc2b"])

    return out.reshape(b0, -1, Dout)                  # '(b n) d -> b n d'


# ----------------------------------------------------------------------------
# Pure-JAX reference (PyTorch semantics, canonical weights)
# ----------------------------------------------------------------------------
def _conv1d_circular_ref(x, w, bias, stride, pad):
    N, C, L = x.shape
    K = w.shape[-1]
    xp = jnp.concatenate([x[..., L - pad:], x, x[..., :pad]], axis=-1)
    Lout = (L + 2 * pad - K) // stride + 1
    cols = jnp.stack([xp[:, :, t * stride:t * stride + K] for t in range(Lout)],
                     axis=1)                                   # (N, Lout, C, K)
    return jnp.einsum("nlck,ock->nol", cols, w) + bias[None, :, None]


def cnn_model_forward_ref(params, lidar, non_lidar):
    b0 = lidar.shape[0]
    x = (lidar.reshape(-1, lidar.shape[-2], lidar.shape[-1])
         if lidar.ndim == 4 else lidar)
    h = jax.nn.relu(_conv1d_circular_ref(x, params["w1"], params["b1"], S1, P1))
    h = jax.nn.relu(_conv1d_circular_ref(h, params["w2"], params["b2"], S2, P2))
    feat = h.reshape(h.shape[0], -1)                           # channel-major
    nl = non_lidar.reshape(-1, non_lidar.shape[-1] * non_lidar.shape[-2])
    feat = jnp.concatenate([feat, nl], axis=-1)
    f1 = jax.nn.relu(feat @ params["fc1_w"].T + params["fc1_b"])
    f2 = f1 @ params["fc2_w"].T + params["fc2_b"]
    return f2.reshape(b0, -1, params["fc2_w"].shape[0])


# ----------------------------------------------------------------------------
if __name__ == "__main__":
    def _run_case(seed, num_lidar, num_non_lidar, nframes, output_dim, B, n):
        key = jax.random.PRNGKey(seed)
        kparam, klid, knl = jax.random.split(key, 3)
        params = init_params(kparam, num_lidar, num_non_lidar, nframes, output_dim)
        kp = prepare_params(params, num_lidar)
        lidar = jax.random.normal(klid, (B, n, nframes, num_lidar), jnp.float32)
        non_lidar = jax.random.normal(knl, (B, n, nframes, num_non_lidar),
                                      jnp.float32)
        fwd = jax.jit(cnn_model_forward)
        out = jax.block_until_ready(fwd(kp, lidar, non_lidar))
        ref = cnn_model_forward_ref(params, lidar, non_lidar)
        assert out.shape == (B, n, output_dim), out.shape
        assert jnp.allclose(out, ref, atol=2e-4, rtol=2e-4), (
            float(jnp.max(jnp.abs(out - ref))))

    # Case 1: N = 16 rows -> 2 parallel grid steps (v7x megacore path).
    _run_case(0, num_lidar=16, num_non_lidar=8, nframes=1, output_dim=32, B=2, n=8)
    # Case 2: odd L (not divisible by the stride) and nframes > 1 to exercise
    # the circular-padding index math; single grid step path.
    _run_case(1, num_lidar=15, num_non_lidar=5, nframes=2, output_dim=16, B=1, n=8)

    # TODO(synk): self.norm (LayerNorm) exists in __init__ but is unused in
    # forward(), so it is intentionally not applied.
    print("KERNEL_OK")
</pallas_src>

<mosaic_0001>
module attributes {stable_mosaic.version = 11 : i64} {
  func.func @_fused_kernel(%arg0: i32, %arg1: memref<8x16xf32, #tpu.memory_space<vmem>>, %arg2: memref<8x8xf32, #tpu.memory_space<vmem>>, %arg3: memref<5x32xf32, #tpu.memory_space<vmem>>, %arg4: memref<1x32xf32, #tpu.memory_space<vmem>>, %arg5: memref<96x32xf32, #tpu.memory_space<vmem>>, %arg6: memref<1x32xf32, #tpu.memory_space<vmem>>, %arg7: memref<4x32x64xf32, #tpu.memory_space<vmem>>, %arg8: memref<8x64xf32, #tpu.memory_space<vmem>>, %arg9: memref<1x64xf32, #tpu.memory_space<vmem>>, %arg10: memref<64x32xf32, #tpu.memory_space<vmem>>, %arg11: memref<1x32xf32, #tpu.memory_space<vmem>>, %arg12: memref<8x32xf32, #tpu.memory_space<vmem>>) attributes {dimension_semantics = [#tpu.dimension_semantics<parallel>], iteration_bounds = array<i64: 2>, scalar_prefetch = 0 : i64, scratch_operands = 0 : i64, tpu.core_type = #tpu.core_type<tc>, window_params = [{transform_indices = @transform_0, window_bounds = array<i64: 8, 16>}, {transform_indices = @transform_1, window_bounds = array<i64: 8, 8>}, {pipeline_mode = #tpu.pipeline_mode<synchronous>, transform_indices = @transform_2, window_bounds = array<i64: 5, 32>}, {pipeline_mode = #tpu.pipeline_mode<synchronous>, transform_indices = @transform_3, window_bounds = array<i64: 1, 32>}, {pipeline_mode = #tpu.pipeline_mode<synchronous>, transform_indices = @transform_4, window_bounds = array<i64: 96, 32>}, {pipeline_mode = #tpu.pipeline_mode<synchronous>, transform_indices = @transform_5, window_bounds = array<i64: 1, 32>}, {pipeline_mode = #tpu.pipeline_mode<synchronous>, transform_indices = @transform_6, window_bounds = array<i64: 4, 32, 64>}, {pipeline_mode = #tpu.pipeline_mode<synchronous>, transform_indices = @transform_7, window_bounds = array<i64: 8, 64>}, {pipeline_mode = #tpu.pipeline_mode<synchronous>, transform_indices = @transform_8, window_bounds = array<i64: 1, 64>}, {pipeline_mode = #tpu.pipeline_mode<synchronous>, transform_indices = @transform_9, window_bounds = array<i64: 64, 32>}, {pipeline_mode = #tpu.pipeline_mode<synchronous>, transform_indices = @transform_10, window_bounds = array<i64: 1, 32>}, {transform_indices = @transform_11, window_bounds = array<i64: 8, 32>}]} {
    %c0 = arith.constant 0 : index
    %c0_0 = arith.constant 0 : index
    %0 = vector.load %arg1[%c0, %c0_0] : memref<8x16xf32, #tpu.memory_space<vmem>>, vector<8x16xf32>
    %c0_1 = arith.constant 0 : index
    %c0_2 = arith.constant 0 : index
    %1 = vector.load %arg3[%c0_1, %c0_2] : memref<5x32xf32, #tpu.memory_space<vmem>>, vector<5x32xf32>
    %c0_3 = arith.constant 0 : index
    %c0_4 = arith.constant 0 : index
    %2 = vector.load %arg4[%c0_3, %c0_4] : memref<1x32xf32, #tpu.memory_space<vmem>>, vector<1x32xf32>
    %3 = vector.extract_strided_slice %0 {offsets = [0, 14], sizes = [8, 1], strides = [1, 1]} : vector<8x16xf32> to vector<8x1xf32>
    %4 = vector.extract_strided_slice %1 {offsets = [0, 0], sizes = [1, 32], strides = [1, 1]} : vector<5x32xf32> to vector<1x32xf32>
    %5 = vector.broadcast %3 : vector<8x1xf32> to vector<8x32xf32>
    %6 = vector.broadcast %4 : vector<1x32xf32> to vector<8x32xf32>
    %7 = arith.mulf %5, %6 : vector<8x32xf32>
    %8 = vector.broadcast %2 : vector<1x32xf32> to vector<8x32xf32>
    %9 = arith.addf %8, %7 : vector<8x32xf32>
    %10 = vector.extract_strided_slice %0 {offsets = [0, 15], sizes = [8, 1], strides = [1, 1]} : vector<8x16xf32> to vector<8x1xf32>
    %11 = vector.extract_strided_slice %1 {offsets = [1, 0], sizes = [1, 32], strides = [1, 1]} : vector<5x32xf32> to vector<1x32xf32>
    %12 = vector.broadcast %10 : vector<8x1xf32> to vector<8x32xf32>
    %13 = vector.broadcast %11 : vector<1x32xf32> to vector<8x32xf32>
    %14 = arith.mulf %12, %13 : vector<8x32xf32>
    %15 = arith.addf %9, %14 : vector<8x32xf32>
    %16 = vector.extract_strided_slice %0 {offsets = [0, 0], sizes = [8, 1], strides = [1, 1]} : vector<8x16xf32> to vector<8x1xf32>
    %17 = vector.extract_strided_slice %1 {offsets = [2, 0], sizes = [1, 32], strides = [1, 1]} : vector<5x32xf32> to vector<1x32xf32>
    %18 = vector.broadcast %16 : vector<8x1xf32> to vector<8x32xf32>
    %19 = vector.broadcast %17 : vector<1x32xf32> to vector<8x32xf32>
    %20 = arith.mulf %18, %19 : vector<8x32xf32>
    %21 = arith.addf %15, %20 : vector<8x32xf32>
    %22 = vector.extract_strided_slice %0 {offsets = [0, 1], sizes = [8, 1], strides = [1, 1]} : vector<8x16xf32> to vector<8x1xf32>
    %23 = vector.extract_strided_slice %1 {offsets = [3, 0], sizes = [1, 32], strides = [1, 1]} : vector<5x32xf32> to vector<1x32xf32>
    %24 = vector.broadcast %22 : vector<8x1xf32> to vector<8x32xf32>
    %25 = vector.broadcast %23 : vector<1x32xf32> to vector<8x32xf32>
    %26 = arith.mulf %24, %25 : vector<8x32xf32>
    %27 = arith.addf %21, %26 : vector<8x32xf32>
    %28 = vector.extract_strided_slice %0 {offsets = [0, 2], sizes = [8, 1], strides = [1, 1]} : vector<8x16xf32> to vector<8x1xf32>
    %29 = vector.extract_strided_slice %1 {offsets = [4, 0], sizes = [1, 32], strides = [1, 1]} : vector<5x32xf32> to vector<1x32xf32>
    %30 = vector.broadcast %28 : vector<8x1xf32> to vector<8x32xf32>
    %31 = vector.broadcast %29 : vector<1x32xf32> to vector<8x32xf32>
    %32 = arith.mulf %30, %31 : vector<8x32xf32>
    %33 = arith.addf %27, %32 : vector<8x32xf32>
    %cst = arith.constant 0.000000e+00 : f32
    %34 = vector.broadcast %cst : f32 to vector<8x32xf32>
    %35 = arith.maximumf %33, %34 : vector<8x32xf32>
    %36 = vector.extract_strided_slice %0 {offsets = [0, 0], sizes = [8, 1], strides = [1, 1]} : vector<8x16xf32> to vector<8x1xf32>
    %37 = vector.extract_strided_slice %1 {offsets = [0, 0], sizes = [1, 32], strides = [1, 1]} : vector<5x32xf32> to vector<1x32xf32>
    %38 = vector.broadcast %36 : vector<8x1xf32> to vector<8x32xf32>
    %39 = vector.broadcast %37 : vector<1x32xf32> to vector<8x32xf32>
    %40 = arith.mulf %38, %39 : vector<8x32xf32>
    %41 = vector.broadcast %2 : vector<1x32xf32> to vector<8x32xf32>
    %42 = arith.addf %41, %40 : vector<8x32xf32>
    %43 = vector.extract_strided_slice %0 {offsets = [0, 1], sizes = [8, 1], strides = [1, 1]} : vector<8x16xf32> to vector<8x1xf32>
    %44 = vector.extract_strided_slice %1 {offsets = [1, 0], sizes = [1, 32], strides = [1, 1]} : vector<5x32xf32> to vector<1x32xf32>
    %45 = vector.broadcast %43 : vector<8x1xf32> to vector<8x32xf32>
    %46 = vector.broadcast %44 : vector<1x32xf32> to vector<8x32xf32>
    %47 = arith.mulf %45, %46 : vector<8x32xf32>
    %48 = arith.addf %42, %47 : vector<8x32xf32>
    %49 = vector.extract_strided_slice %0 {offsets = [0, 2], sizes = [8, 1], strides = [1, 1]} : vector<8x16xf32> to vector<8x1xf32>
    %50 = vector.extract_strided_slice %1 {offsets = [2, 0], sizes = [1, 32], strides = [1, 1]} : vector<5x32xf32> to vector<1x32xf32>
    %51 = vector.broadcast %49 : vector<8x1xf32> to vector<8x32xf32>
    %52 = vector.broadcast %50 : vector<1x32xf32> to vector<8x32xf32>
    %53 = arith.mulf %51, %52 : vector<8x32xf32>
    %54 = arith.addf %48, %53 : vector<8x32xf32>
    %55 = vector.extract_strided_slice %0 {offsets = [0, 3], sizes = [8, 1], strides = [1, 1]} : vector<8x16xf32> to vector<8x1xf32>
    %56 = vector.extract_strided_slice %1 {offsets = [3, 0], sizes = [1, 32], strides = [1, 1]} : vector<5x32xf32> to vector<1x32xf32>
    %57 = vector.broadcast %55 : vector<8x1xf32> to vector<8x32xf32>
    %58 = vector.broadcast %56 : vector<1x32xf32> to vector<8x32xf32>
    %59 = arith.mulf %57, %58 : vector<8x32xf32>
    %60 = arith.addf %54, %59 : vector<8x32xf32>
    %61 = vector.extract_strided_slice %0 {offsets = [0, 4], sizes = [8, 1], strides = [1, 1]} : vector<8x16xf32> to vector<8x1xf32>
    %62 = vector.extract_strided_slice %1 {offsets = [4, 0], sizes = [1, 32], strides = [1, 1]} : vector<5x32xf32> to vector<1x32xf32>
    %63 = vector.broadcast %61 : vector<8x1xf32> to vector<8x32xf32>
    %64 = vector.broadcast %62 : vector<1x32xf32> to vector<8x32xf32>
    %65 = arith.mulf %63, %64 : vector<8x32xf32>
    %66 = arith.addf %60, %65 : vector<8x32xf32>
    %cst_5 = arith.constant 0.000000e+00 : f32
    %67 = vector.broadcast %cst_5 : f32 to vector<8x32xf32>
    %68 = arith.maximumf %66, %67 : vector<8x32xf32>
    %69 = vector.extract_strided_slice %0 {offsets = [0, 2], sizes = [8, 1], strides = [1, 1]} : vector<8x16xf32> to vector<8x1xf32>
    %70 = vector.extract_strided_slice %1 {offsets = [0, 0], sizes = [1, 32], strides = [1, 1]} : vector<5x32xf32> to vector<1x32xf32>
    %71 = vector.broadcast %69 : vector<8x1xf32> to vector<8x32xf32>
    %72 = vector.broadcast %70 : vector<1x32xf32> to vector<8x32xf32>
    %73 = arith.mulf %71, %72 : vector<8x32xf32>
    %74 = vector.broadcast %2 : vector<1x32xf32> to vector<8x32xf32>
    %75 = arith.addf %74, %73 : vector<8x32xf32>
    %76 = vector.extract_strided_slice %0 {offsets = [0, 3], sizes = [8, 1], strides = [1, 1]} : vector<8x16xf32> to vector<8x1xf32>
    %77 = vector.extract_strided_slice %1 {offsets = [1, 0], sizes = [1, 32], strides = [1, 1]} : vector<5x32xf32> to vector<1x32xf32>
    %78 = vector.broadcast %76 : vector<8x1xf32> to vector<8x32xf32>
    %79 = vector.broadcast %77 : vector<1x32xf32> to vector<8x32xf32>
    %80 = arith.mulf %78, %79 : vector<8x32xf32>
    %81 = arith.addf %75, %80 : vector<8x32xf32>
    %82 = vector.extract_strided_slice %0 {offsets = [0, 4], sizes = [8, 1], strides = [1, 1]} : vector<8x16xf32> to vector<8x1xf32>
    %83 = vector.extract_strided_slice %1 {offsets = [2, 0], sizes = [1, 32], strides = [1, 1]} : vector<5x32xf32> to vector<1x32xf32>
    %84 = vector.broadcast %82 : vector<8x1xf32> to vector<8x32xf32>
    %85 = vector.broadcast %83 : vector<1x32xf32> to vector<8x32xf32>
    %86 = arith.mulf %84, %85 : vector<8x32xf32>
    %87 = arith.addf %81, %86 : vector<8x32xf32>
    %88 = vector.extract_strided_slice %0 {offsets = [0, 5], sizes = [8, 1], strides = [1, 1]} : vector<8x16xf32> to vector<8x1xf32>
    %89 = vector.extract_strided_slice %1 {offsets = [3, 0], sizes = [1, 32], strides = [1, 1]} : vector<5x32xf32> to vector<1x32xf32>
    %90 = vector.broadcast %88 : vector<8x1xf32> to vector<8x32xf32>
    %91 = vector.broadcast %89 : vector<1x32xf32> to vector<8x32xf32>
    %92 = arith.mulf %90, %91 : vector<8x32xf32>
    %93 = arith.addf %87, %92 : vector<8x32xf32>
    %94 = vector.extract_strided_slice %0 {offsets = [0, 6], sizes = [8, 1], strides = [1, 1]} : vector<8x16xf32> to vector<8x1xf32>
    %95 = vector.extract_strided_slice %1 {offsets = [4, 0], sizes = [1, 32], strides = [1, 1]} : vector<5x32xf32> to vector<1x32xf32>
    %96 = vector.broadcast %94 : vector<8x1xf32> to vector<8x32xf32>
    %97 = vector.broadcast %95 : vector<1x32xf32> to vector<8x32xf32>
    %98 = arith.mulf %96, %97 : vector<8x32xf32>
    %99 = arith.addf %93, %98 : vector<8x32xf32>
    %cst_6 = arith.constant 0.000000e+00 : f32
    %100 = vector.broadcast %cst_6 : f32 to vector<8x32xf32>
    %101 = arith.maximumf %99, %100 : vector<8x32xf32>
    %102 = vector.extract_strided_slice %0 {offsets = [0, 4], sizes = [8, 1], strides = [1, 1]} : vector<8x16xf32> to vector<8x1xf32>
    %103 = vector.extract_strided_slice %1 {offsets = [0, 0], sizes = [1, 32], strides = [1, 1]} : vector<5x32xf32> to vector<1x32xf32>
    %104 = vector.broadcast %102 : vector<8x1xf32> to vector<8x32xf32>
    %105 = vector.broadcast %103 : vector<1x32xf32> to vector<8x32xf32>
    %106 = arith.mulf %104, %105 : vector<8x32xf32>
    %107 = vector.broadcast %2 : vector<1x32xf32> to vector<8x32xf32>
    %108 = arith.addf %107, %106 : vector<8x32xf32>
    %109 = vector.extract_strided_slice %0 {offsets = [0, 5], sizes = [8, 1], strides = [1, 1]} : vector<8x16xf32> to vector<8x1xf32>
    %110 = vector.extract_strided_slice %1 {offsets = [1, 0], sizes = [1, 32], strides = [1, 1]} : vector<5x32xf32> to vector<1x32xf32>
    %111 = vector.broadcast %109 : vector<8x1xf32> to vector<8x32xf32>
    %112 = vector.broadcast %110 : vector<1x32xf32> to vector<8x32xf32>
    %113 = arith.mulf %111, %112 : vector<8x32xf32>
    %114 = arith.addf %108, %113 : vector<8x32xf32>
    %115 = vector.extract_strided_slice %0 {offsets = [0, 6], sizes = [8, 1], strides = [1, 1]} : vector<8x16xf32> to vector<8x1xf32>
    %116 = vector.extract_strided_slice %1 {offsets = [2, 0], sizes = [1, 32], strides = [1, 1]} : vector<5x32xf32> to vector<1x32xf32>
    %117 = vector.broadcast %115 : vector<8x1xf32> to vector<8x32xf32>
    %118 = vector.broadcast %116 : vector<1x32xf32> to vector<8x32xf32>
    %119 = arith.mulf %117, %118 : vector<8x32xf32>
    %120 = arith.addf %114, %119 : vector<8x32xf32>
    %121 = vector.extract_strided_slice %0 {offsets = [0, 7], sizes = [8, 1], strides = [1, 1]} : vector<8x16xf32> to vector<8x1xf32>
    %122 = vector.extract_strided_slice %1 {offsets = [3, 0], sizes = [1, 32], strides = [1, 1]} : vector<5x32xf32> to vector<1x32xf32>
    %123 = vector.broadcast %121 : vector<8x1xf32> to vector<8x32xf32>
    %124 = vector.broadcast %122 : vector<1x32xf32> to vector<8x32xf32>
    %125 = arith.mulf %123, %124 : vector<8x32xf32>
    %126 = arith.addf %120, %125 : vector<8x32xf32>
    %127 = vector.extract_strided_slice %0 {offsets = [0, 8], sizes = [8, 1], strides = [1, 1]} : vector<8x16xf32> to vector<8x1xf32>
    %128 = vector.extract_strided_slice %1 {offsets = [4, 0], sizes = [1, 32], strides = [1, 1]} : vector<5x32xf32> to vector<1x32xf32>
    %129 = vector.broadcast %127 : vector<8x1xf32> to vector<8x32xf32>
    %130 = vector.broadcast %128 : vector<1x32xf32> to vector<8x32xf32>
    %131 = arith.mulf %129, %130 : vector<8x32xf32>
    %132 = arith.addf %126, %131 : vector<8x32xf32>
    %cst_7 = arith.constant 0.000000e+00 : f32
    %133 = vector.broadcast %cst_7 : f32 to vector<8x32xf32>
    %134 = arith.maximumf %132, %133 : vector<8x32xf32>
    %135 = vector.extract_strided_slice %0 {offsets = [0, 6], sizes = [8, 1], strides = [1, 1]} : vector<8x16xf32> to vector<8x1xf32>
    %136 = vector.extract_strided_slice %1 {offsets = [0, 0], sizes = [1, 32], strides = [1, 1]} : vector<5x32xf32> to vector<1x32xf32>
    %137 = vector.broadcast %135 : vector<8x1xf32> to vector<8x32xf32>
    %138 = vector.broadcast %136 : vector<1x32xf32> to vector<8x32xf32>
    %139 = arith.mulf %137, %138 : vector<8x32xf32>
    %140 = vector.broadcast %2 : vector<1x32xf32> to vector<8x32xf32>
    %141 = arith.addf %140, %139 : vector<8x32xf32>
    %142 = vector.extract_strided_slice %0 {offsets = [0, 7], sizes = [8, 1], strides = [1, 1]} : vector<8x16xf32> to vector<8x1xf32>
    %143 = vector.extract_strided_slice %1 {offsets = [1, 0], sizes = [1, 32], strides = [1, 1]} : vector<5x32xf32> to vector<1x32xf32>
    %144 = vector.broadcast %142 : vector<8x1xf32> to vector<8x32xf32>
    %145 = vector.broadcast %143 : vector<1x32xf32> to vector<8x32xf32>
    %146 = arith.mulf %144, %145 : vector<8x32xf32>
    %147 = arith.addf %141, %146 : vector<8x32xf32>
    %148 = vector.extract_strided_slice %0 {offsets = [0, 8], sizes = [8, 1], strides = [1, 1]} : vector<8x16xf32> to vector<8x1xf32>
    %149 = vector.extract_strided_slice %1 {offsets = [2, 0], sizes = [1, 32], strides = [1, 1]} : vector<5x32xf32> to vector<1x32xf32>
    %150 = vector.broadcast %148 : vector<8x1xf32> to vector<8x32xf32>
    %151 = vector.broadcast %149 : vector<1x32xf32> to vector<8x32xf32>
    %152 = arith.mulf %150, %151 : vector<8x32xf32>
    %153 = arith.addf %147, %152 : vector<8x32xf32>
    %154 = vector.extract_strided_slice %0 {offsets = [0, 9], sizes = [8, 1], strides = [1, 1]} : vector<8x16xf32> to vector<8x1xf32>
    %155 = vector.extract_strided_slice %1 {offsets = [3, 0], sizes = [1, 32], strides = [1, 1]} : vector<5x32xf32> to vector<1x32xf32>
    %156 = vector.broadcast %154 : vector<8x1xf32> to vector<8x32xf32>
    %157 = vector.broadcast %155 : vector<1x32xf32> to vector<8x32xf32>
    %158 = arith.mulf %156, %157 : vector<8x32xf32>
    %159 = arith.addf %153, %158 : vector<8x32xf32>
    %160 = vector.extract_strided_slice %0 {offsets = [0, 10], sizes = [8, 1], strides = [1, 1]} : vector<8x16xf32> to vector<8x1xf32>
    %161 = vector.extract_strided_slice %1 {offsets = [4, 0], sizes = [1, 32], strides = [1, 1]} : vector<5x32xf32> to vector<1x32xf32>
    %162 = vector.broadcast %160 : vector<8x1xf32> to vector<8x32xf32>
    %163 = vector.broadcast %161 : vector<1x32xf32> to vector<8x32xf32>
    %164 = arith.mulf %162, %163 : vector<8x32xf32>
    %165 = arith.addf %159, %164 : vector<8x32xf32>
    %cst_8 = arith.constant 0.000000e+00 : f32
    %166 = vector.broadcast %cst_8 : f32 to vector<8x32xf32>
    %167 = arith.maximumf %165, %166 : vector<8x32xf32>
    %168 = vector.extract_strided_slice %0 {offsets = [0, 8], sizes = [8, 1], strides = [1, 1]} : vector<8x16xf32> to vector<8x1xf32>
    %169 = vector.extract_strided_slice %1 {offsets = [0, 0], sizes = [1, 32], strides = [1, 1]} : vector<5x32xf32> to vector<1x32xf32>
    %170 = vector.broadcast %168 : vector<8x1xf32> to vector<8x32xf32>
    %171 = vector.broadcast %169 : vector<1x32xf32> to vector<8x32xf32>
    %172 = arith.mulf %170, %171 : vector<8x32xf32>
    %173 = vector.broadcast %2 : vector<1x32xf32> to vector<8x32xf32>
    %174 = arith.addf %173, %172 : vector<8x32xf32>
    %175 = vector.extract_strided_slice %0 {offsets = [0, 9], sizes = [8, 1], strides = [1, 1]} : vector<8x16xf32> to vector<8x1xf32>
    %176 = vector.extract_strided_slice %1 {offsets = [1, 0], sizes = [1, 32], strides = [1, 1]} : vector<5x32xf32> to vector<1x32xf32>
    %177 = vector.broadcast %175 : vector<8x1xf32> to vector<8x32xf32>
    %178 = vector.broadcast %176 : vector<1x32xf32> to vector<8x32xf32>
    %179 = arith.mulf %177, %178 : vector<8x32xf32>
    %180 = arith.addf %174, %179 : vector<8x32xf32>
    %181 = vector.extract_strided_slice %0 {offsets = [0, 10], sizes = [8, 1], strides = [1, 1]} : vector<8x16xf32> to vector<8x1xf32>
    %182 = vector.extract_strided_slice %1 {offsets = [2, 0], sizes = [1, 32], strides = [1, 1]} : vector<5x32xf32> to vector<1x32xf32>
    %183 = vector.broadcast %181 : vector<8x1xf32> to vector<8x32xf32>
    %184 = vector.broadcast %182 : vector<1x32xf32> to vector<8x32xf32>
    %185 = arith.mulf %183, %184 : vector<8x32xf32>
    %186 = arith.addf %180, %185 : vector<8x32xf32>
    %187 = vector.extract_strided_slice %0 {offsets = [0, 11], sizes = [8, 1], strides = [1, 1]} : vector<8x16xf32> to vector<8x1xf32>
    %188 = vector.extract_strided_slice %1 {offsets = [3, 0], sizes = [1, 32], strides = [1, 1]} : vector<5x32xf32> to vector<1x32xf32>
    %189 = vector.broadcast %187 : vector<8x1xf32> to vector<8x32xf32>
    %190 = vector.broadcast %188 : vector<1x32xf32> to vector<8x32xf32>
    %191 = arith.mulf %189, %190 : vector<8x32xf32>
    %192 = arith.addf %186, %191 : vector<8x32xf32>
    %193 = vector.extract_strided_slice %0 {offsets = [0, 12], sizes = [8, 1], strides = [1, 1]} : vector<8x16xf32> to vector<8x1xf32>
    %194 = vector.extract_strided_slice %1 {offsets = [4, 0], sizes = [1, 32], strides = [1, 1]} : vector<5x32xf32> to vector<1x32xf32>
    %195 = vector.broadcast %193 : vector<8x1xf32> to vector<8x32xf32>
    %196 = vector.broadcast %194 : vector<1x32xf32> to vector<8x32xf32>
    %197 = arith.mulf %195, %196 : vector<8x32xf32>
    %198 = arith.addf %192, %197 : vector<8x32xf32>
    %cst_9 = arith.constant 0.000000e+00 : f32
    %199 = vector.broadcast %cst_9 : f32 to vector<8x32xf32>
    %200 = arith.maximumf %198, %199 : vector<8x32xf32>
    %201 = vector.extract_strided_slice %0 {offsets = [0, 10], sizes = [8, 1], strides = [1, 1]} : vector<8x16xf32> to vector<8x1xf32>
    %202 = vector.extract_strided_slice %1 {offsets = [0, 0], sizes = [1, 32], strides = [1, 1]} : vector<5x32xf32> to vector<1x32xf32>
    %203 = vector.broadcast %201 : vector<8x1xf32> to vector<8x32xf32>
    %204 = vector.broadcast %202 : vector<1x32xf32> to vector<8x32xf32>
    %205 = arith.mulf %203, %204 : vector<8x32xf32>
    %206 = vector.broadcast %2 : vector<1x32xf32> to vector<8x32xf32>
    %207 = arith.addf %206, %205 : vector<8x32xf32>
    %208 = vector.extract_strided_slice %0 {offsets = [0, 11], sizes = [8, 1], strides = [1, 1]} : vector<8x16xf32> to vector<8x1xf32>
    %209 = vector.extract_strided_slice %1 {offsets = [1, 0], sizes = [1, 32], strides = [1, 1]} : vector<5x32xf32> to vector<1x32xf32>
    %210 = vector.broadcast %208 : vector<8x1xf32> to vector<8x32xf32>
    %211 = vector.broadcast %209 : vector<1x32xf32> to vector<8x32xf32>
    %212 = arith.mulf %210, %211 : vector<8x32xf32>
    %213 = arith.addf %207, %212 : vector<8x32xf32>
    %214 = vector.extract_strided_slice %0 {offsets = [0, 12], sizes = [8, 1], strides = [1, 1]} : vector<8x16xf32> to vector<8x1xf32>
    %215 = vector.extract_strided_slice %1 {offsets = [2, 0], sizes = [1, 32], strides = [1, 1]} : vector<5x32xf32> to vector<1x32xf32>
    %216 = vector.broadcast %214 : vector<8x1xf32> to vector<8x32xf32>
    %217 = vector.broadcast %215 : vector<1x32xf32> to vector<8x32xf32>
    %218 = arith.mulf %216, %217 : vector<8x32xf32>
    %219 = arith.addf %213, %218 : vector<8x32xf32>
    %220 = vector.extract_strided_slice %0 {offsets = [0, 13], sizes = [8, 1], strides = [1, 1]} : vector<8x16xf32> to vector<8x1xf32>
    %221 = vector.extract_strided_slice %1 {offsets = [3, 0], sizes = [1, 32], strides = [1, 1]} : vector<5x32xf32> to vector<1x32xf32>
    %222 = vector.broadcast %220 : vector<8x1xf32> to vector<8x32xf32>
    %223 = vector.broadcast %221 : vector<1x32xf32> to vector<8x32xf32>
    %224 = arith.mulf %222, %223 : vector<8x32xf32>
    %225 = arith.addf %219, %224 : vector<8x32xf32>
    %226 = vector.extract_strided_slice %0 {offsets = [0, 14], sizes = [8, 1], strides = [1, 1]} : vector<8x16xf32> to vector<8x1xf32>
    %227 = vector.extract_strided_slice %1 {offsets = [4, 0], sizes = [1, 32], strides = [1, 1]} : vector<5x32xf32> to vector<1x32xf32>
    %228 = vector.broadcast %226 : vector<8x1xf32> to vector<8x32xf32>
    %229 = vector.broadcast %227 : vector<1x32xf32> to vector<8x32xf32>
    %230 = arith.mulf %228, %229 : vector<8x32xf32>
    %231 = arith.addf %225, %230 : vector<8x32xf32>
    %cst_10 = arith.constant 0.000000e+00 : f32
    %232 = vector.broadcast %cst_10 : f32 to vector<8x32xf32>
    %233 = arith.maximumf %231, %232 : vector<8x32xf32>
    %234 = vector.extract_strided_slice %0 {offsets = [0, 12], sizes = [8, 1], strides = [1, 1]} : vector<8x16xf32> to vector<8x1xf32>
    %235 = vector.extract_strided_slice %1 {offsets = [0, 0], sizes = [1, 32], strides = [1, 1]} : vector<5x32xf32> to vector<1x32xf32>
    %236 = vector.broadcast %234 : vector<8x1xf32> to vector<8x32xf32>
    %237 = vector.broadcast %235 : vector<1x32xf32> to vector<8x32xf32>
    %238 = arith.mulf %236, %237 : vector<8x32xf32>
    %239 = vector.broadcast %2 : vector<1x32xf32> to vector<8x32xf32>
    %240 = arith.addf %239, %238 : vector<8x32xf32>
    %241 = vector.extract_strided_slice %0 {offsets = [0, 13], sizes = [8, 1], strides = [1, 1]} : vector<8x16xf32> to vector<8x1xf32>
    %242 = vector.extract_strided_slice %1 {offsets = [1, 0], sizes = [1, 32], strides = [1, 1]} : vector<5x32xf32> to vector<1x32xf32>
    %243 = vector.broadcast %241 : vector<8x1xf32> to vector<8x32xf32>
    %244 = vector.broadcast %242 : vector<1x32xf32> to vector<8x32xf32>
    %245 = arith.mulf %243, %244 : vector<8x32xf32>
    %246 = arith.addf %240, %245 : vector<8x32xf32>
    %247 = vector.extract_strided_slice %0 {offsets = [0, 14], sizes = [8, 1], strides = [1, 1]} : vector<8x16xf32> to vector<8x1xf32>
    %248 = vector.extract_strided_slice %1 {offsets = [2, 0], sizes = [1, 32], strides = [1, 1]} : vector<5x32xf32> to vector<1x32xf32>
    %249 = vector.broadcast %247 : vector<8x1xf32> to vector<8x32xf32>
    %250 = vector.broadcast %248 : vector<1x32xf32> to vector<8x32xf32>
    %251 = arith.mulf %249, %250 : vector<8x32xf32>
    %252 = arith.addf %246, %251 : vector<8x32xf32>
    %253 = vector.extract_strided_slice %0 {offsets = [0, 15], sizes = [8, 1], strides = [1, 1]} : vector<8x16xf32> to vector<8x1xf32>
    %254 = vector.extract_strided_slice %1 {offsets = [3, 0], sizes = [1, 32], strides = [1, 1]} : vector<5x32xf32> to vector<1x32xf32>
    %255 = vector.broadcast %253 : vector<8x1xf32> to vector<8x32xf32>
    %256 = vector.broadcast %254 : vector<1x32xf32> to vector<8x32xf32>
    %257 = arith.mulf %255, %256 : vector<8x32xf32>
    %258 = arith.addf %252, %257 : vector<8x32xf32>
    %259 = vector.extract_strided_slice %0 {offsets = [0, 0], sizes = [8, 1], strides = [1, 1]} : vector<8x16xf32> to vector<8x1xf32>
    %260 = vector.extract_strided_slice %1 {offsets = [4, 0], sizes = [1, 32], strides = [1, 1]} : vector<5x32xf32> to vector<1x32xf32>
    %261 = vector.broadcast %259 : vector<8x1xf32> to vector<8x32xf32>
    %262 = vector.broadcast %260 : vector<1x32xf32> to vector<8x32xf32>
    %263 = arith.mulf %261, %262 : vector<8x32xf32>
    %264 = arith.addf %258, %263 : vector<8x32xf32>
    %cst_11 = arith.constant 0.000000e+00 : f32
    %265 = vector.broadcast %cst_11 : f32 to vector<8x32xf32>
    %266 = arith.maximumf %264, %265 : vector<8x32xf32>
    %c0_12 = arith.constant 0 : index
    %c0_13 = arith.constant 0 : index
    %267 = vector.load %arg5[%c0_12, %c0_13] : memref<96x32xf32, #tpu.memory_space<vmem>>, vector<96x32xf32>
    %c0_14 = arith.constant 0 : index
    %c0_15 = arith.constant 0 : index
    %268 = vector.load %arg6[%c0_14, %c0_15] : memref<1x32xf32, #tpu.memory_space<vmem>>, vector<1x32xf32>
    %c0_16 = arith.constant 0 : index
    %c0_17 = arith.constant 0 : index
    %269 = vector.load %arg2[%c0_16, %c0_17] : memref<8x8xf32, #tpu.memory_space<vmem>>, vector<8x8xf32>
    %c0_18 = arith.constant 0 : index
    %c0_19 = arith.constant 0 : index
    %270 = vector.load %arg8[%c0_18, %c0_19] : memref<8x64xf32, #tpu.memory_space<vmem>>, vector<8x64xf32>
    %cst_20 = arith.constant dense<0.000000e+00> : vector<8x64xf32>
    %271 = tpu.matmul %269, %270, %cst_20 {dimension_numbers = #tpu.dot_dimension_numbers<[1], [0], [0], [1], [0, 0, 1, 1], [], []>} : vector<8x8xf32>, vector<8x64xf32>, vector<8x64xf32> -> vector<8x64xf32>
    %c0_21 = arith.constant 0 : index
    %c0_22 = arith.constant 0 : index
    %272 = vector.load %arg9[%c0_21, %c0_22] : memref<1x64xf32, #tpu.memory_space<vmem>>, vector<1x64xf32>
    %273 = vector.broadcast %272 : vector<1x64xf32> to vector<8x64xf32>
    %274 = arith.addf %271, %273 : vector<8x64xf32>
    %275 = tpu.concatenate %266, %35, %68 in 1 : vector<8x32xf32>, vector<8x32xf32>, vector<8x32xf32> -> vector<8x96xf32>
    %cst_23 = arith.constant dense<0.000000e+00> : vector<8x32xf32>
    %276 = tpu.matmul %275, %267, %cst_23 {dimension_numbers = #tpu.dot_dimension_numbers<[1], [0], [0], [1], [0, 0, 1, 1], [], []>} : vector<8x96xf32>, vector<96x32xf32>, vector<8x32xf32> -> vector<8x32xf32>
    %277 = vector.broadcast %268 : vector<1x32xf32> to vector<8x32xf32>
    %278 = arith.addf %276, %277 : vector<8x32xf32>
    %cst_24 = arith.constant 0.000000e+00 : f32
    %279 = vector.broadcast %cst_24 : f32 to vector<8x32xf32>
    %280 = arith.maximumf %278, %279 : vector<8x32xf32>
    %c0_25 = arith.constant 0 : index
    %c0_26 = arith.constant 0 : index
    %c0_27 = arith.constant 0 : index
    %281 = vector.load %arg7[%c0_25, %c0_26, %c0_27] : memref<4x32x64xf32, #tpu.memory_space<vmem>>, vector<1x32x64xf32>
    %282 = vector.shape_cast %281 : vector<1x32x64xf32> to vector<32x64xf32>
    %cst_28 = arith.constant dense<0.000000e+00> : vector<8x64xf32>
    %283 = tpu.matmul %280, %282, %cst_28 {dimension_numbers = #tpu.dot_dimension_numbers<[1], [0], [0], [1], [0, 0, 1, 1], [], []>} : vector<8x32xf32>, vector<32x64xf32>, vector<8x64xf32> -> vector<8x64xf32>
    %284 = arith.addf %274, %283 : vector<8x64xf32>
    %285 = tpu.concatenate %68, %101, %134 in 1 : vector<8x32xf32>, vector<8x32xf32>, vector<8x32xf32> -> vector<8x96xf32>
    %cst_29 = arith.constant dense<0.000000e+00> : vector<8x32xf32>
    %286 = tpu.matmul %285, %267, %cst_29 {dimension_numbers = #tpu.dot_dimension_numbers<[1], [0], [0], [1], [0, 0, 1, 1], [], []>} : vector<8x96xf32>, vector<96x32xf32>, vector<8x32xf32> -> vector<8x32xf32>
    %287 = vector.broadcast %268 : vector<1x32xf32> to vector<8x32xf32>
    %288 = arith.addf %286, %287 : vector<8x32xf32>
    %cst_30 = arith.constant 0.000000e+00 : f32
    %289 = vector.broadcast %cst_30 : f32 to vector<8x32xf32>
    %290 = arith.maximumf %288, %289 : vector<8x32xf32>
    %c1 = arith.constant 1 : index
    %c0_31 = arith.constant 0 : index
    %c0_32 = arith.constant 0 : index
    %291 = vector.load %arg7[%c1, %c0_31, %c0_32] : memref<4x32x64xf32, #tpu.memory_space<vmem>>, vector<1x32x64xf32>
    %292 = vector.shape_cast %291 : vector<1x32x64xf32> to vector<32x64xf32>
    %cst_33 = arith.constant dense<0.000000e+00> : vector<8x64xf32>
    %293 = tpu.matmul %290, %292, %cst_33 {dimension_numbers = #tpu.dot_dimension_numbers<[1], [0], [0], [1], [0, 0, 1, 1], [], []>} : vector<8x32xf32>, vector<32x64xf32>, vector<8x64xf32> -> vector<8x64xf32>
    %294 = arith.addf %284, %293 : vector<8x64xf32>
    %295 = tpu.concatenate %134, %167, %200 in 1 : vector<8x32xf32>, vector<8x32xf32>, vector<8x32xf32> -> vector<8x96xf32>
    %cst_34 = arith.constant dense<0.000000e+00> : vector<8x32xf32>
    %296 = tpu.matmul %295, %267, %cst_34 {dimension_numbers = #tpu.dot_dimension_numbers<[1], [0], [0], [1], [0, 0, 1, 1], [], []>} : vector<8x96xf32>, vector<96x32xf32>, vector<8x32xf32> -> vector<8x32xf32>
    %297 = vector.broadcast %268 : vector<1x32xf32> to vector<8x32xf32>
    %298 = arith.addf %296, %297 : vector<8x32xf32>
    %cst_35 = arith.constant 0.000000e+00 : f32
    %299 = vector.broadcast %cst_35 : f32 to vector<8x32xf32>
    %300 = arith.maximumf %298, %299 : vector<8x32xf32>
    %c2 = arith.constant 2 : index
    %c0_36 = arith.constant 0 : index
    %c0_37 = arith.constant 0 : index
    %301 = vector.load %arg7[%c2, %c0_36, %c0_37] : memref<4x32x64xf32, #tpu.memory_space<vmem>>, vector<1x32x64xf32>
    %302 = vector.shape_cast %301 : vector<1x32x64xf32> to vector<32x64xf32>
    %cst_38 = arith.constant dense<0.000000e+00> : vector<8x64xf32>
    %303 = tpu.matmul %300, %302, %cst_38 {dimension_numbers = #tpu.dot_dimension_numbers<[1], [0], [0], [1], [0, 0, 1, 1], [], []>} : vector<8x32xf32>, vector<32x64xf32>, vector<8x64xf32> -> vector<8x64xf32>
    %304 = arith.addf %294, %303 : vector<8x64xf32>
    %305 = tpu.concatenate %200, %233, %266 in 1 : vector<8x32xf32>, vector<8x32xf32>, vector<8x32xf32> -> vector<8x96xf32>
    %cst_39 = arith.constant dense<0.000000e+00> : vector<8x32xf32>
    %306 = tpu.matmul %305, %267, %cst_39 {dimension_numbers = #tpu.dot_dimension_numbers<[1], [0], [0], [1], [0, 0, 1, 1], [], []>} : vector<8x96xf32>, vector<96x32xf32>, vector<8x32xf32> -> vector<8x32xf32>
    %307 = vector.broadcast %268 : vector<1x32xf32> to vector<8x32xf32>
    %308 = arith.addf %306, %307 : vector<8x32xf32>
    %cst_40 = arith.constant 0.000000e+00 : f32
    %309 = vector.broadcast %cst_40 : f32 to vector<8x32xf32>
    %310 = arith.maximumf %308, %309 : vector<8x32xf32>
    %c3 = arith.constant 3 : index
    %c0_41 = arith.constant 0 : index
    %c0_42 = arith.constant 0 : index
    %311 = vector.load %arg7[%c3, %c0_41, %c0_42] : memref<4x32x64xf32, #tpu.memory_space<vmem>>, vector<1x32x64xf32>
    %312 = vector.shape_cast %311 : vector<1x32x64xf32> to vector<32x64xf32>
    %cst_43 = arith.constant dense<0.000000e+00> : vector<8x64xf32>
    %313 = tpu.matmul %310, %312, %cst_43 {dimension_numbers = #tpu.dot_dimension_numbers<[1], [0], [0], [1], [0, 0, 1, 1], [], []>} : vector<8x32xf32>, vector<32x64xf32>, vector<8x64xf32> -> vector<8x64xf32>
    %314 = arith.addf %304, %313 : vector<8x64xf32>
    %cst_44 = arith.constant 0.000000e+00 : f32
    %315 = vector.broadcast %cst_44 : f32 to vector<8x64xf32>
    %316 = arith.maximumf %314, %315 : vector<8x64xf32>
    %c0_45 = arith.constant 0 : index
    %c0_46 = arith.constant 0 : index
    %317 = vector.load %arg10[%c0_45, %c0_46] : memref<64x32xf32, #tpu.memory_space<vmem>>, vector<64x32xf32>
    %cst_47 = arith.constant dense<0.000000e+00> : vector<8x32xf32>
    %318 = tpu.matmul %316, %317, %cst_47 {dimension_numbers = #tpu.dot_dimension_numbers<[1], [0], [0], [1], [0, 0, 1, 1], [], []>} : vector<8x64xf32>, vector<64x32xf32>, vector<8x32xf32> -> vector<8x32xf32>
    %c0_48 = arith.constant 0 : index
    %c0_49 = arith.constant 0 : index
    %319 = vector.load %arg11[%c0_48, %c0_49] : memref<1x32xf32, #tpu.memory_space<vmem>>, vector<1x32xf32>
    %320 = vector.broadcast %319 : vector<1x32xf32> to vector<8x32xf32>
    %321 = arith.addf %318, %320 : vector<8x32xf32>
    %c0_50 = arith.constant 0 : index
    %c0_51 = arith.constant 0 : index
    %322 = vector.load %arg12[%c0_50, %c0_51] : memref<8x32xf32, #tpu.memory_space<vmem>>, vector<8x32xf32>
    tpu.vector_store %arg12[%c0_50, %c0_51], %321 {strides = array<i32>} : memref<8x32xf32, #tpu.memory_space<vmem>>, vector<8x32xf32>,
    return
  }
  func.func @transform_0(%arg0: i32) -> (i32, i32) {
    %c0_i32 = arith.constant 0 : i32
    %c0_i32_0 = arith.constant 0 : i32
    return %arg0, %c0_i32 : i32, i32
  }
  func.func @transform_1(%arg0: i32) -> (i32, i32) {
    %c0_i32 = arith.constant 0 : i32
    %c0_i32_0 = arith.constant 0 : i32
    return %arg0, %c0_i32 : i32, i32
  }
  func.func @transform_2(%arg0: i32) -> (i32, i32) {
    %c0_i32 = arith.constant 0 : i32
    %c0_i32_0 = arith.constant 0 : i32
    %c0_i32_1 = arith.constant 0 : i32
    return %c0_i32, %c0_i32_0 : i32, i32
  }
  func.func @transform_3(%arg0: i32) -> (i32, i32) {
    %c0_i32 = arith.constant 0 : i32
    %c0_i32_0 = arith.constant 0 : i32
    %c0_i32_1 = arith.constant 0 : i32
    return %c0_i32, %c0_i32_0 : i32, i32
  }
  func.func @transform_4(%arg0: i32) -> (i32, i32) {
    %c0_i32 = arith.constant 0 : i32
    %c0_i32_0 = arith.constant 0 : i32
    %c0_i32_1 = arith.constant 0 : i32
    return %c0_i32, %c0_i32_0 : i32, i32
  }
  func.func @transform_5(%arg0: i32) -> (i32, i32) {
    %c0_i32 = arith.constant 0 : i32
    %c0_i32_0 = arith.constant 0 : i32
    %c0_i32_1 = arith.constant 0 : i32
    return %c0_i32, %c0_i32_0 : i32, i32
  }
  func.func @transform_6(%arg0: i32) -> (i32, i32, i32) {
    %c0_i32 = arith.constant 0 : i32
    %c0_i32_0 = arith.constant 0 : i32
    %c0_i32_1 = arith.constant 0 : i32
    %c0_i32_2 = arith.constant 0 : i32
    return %c0_i32, %c0_i32_0, %c0_i32_1 : i32, i32, i32
  }
  func.func @transform_7(%arg0: i32) -> (i32, i32) {
    %c0_i32 = arith.constant 0 : i32
    %c0_i32_0 = arith.constant 0 : i32
    %c0_i32_1 = arith.constant 0 : i32
    return %c0_i32, %c0_i32_0 : i32, i32
  }
  func.func @transform_8(%arg0: i32) -> (i32, i32) {
    %c0_i32 = arith.constant 0 : i32
    %c0_i32_0 = arith.constant 0 : i32
    %c0_i32_1 = arith.constant 0 : i32
    return %c0_i32, %c0_i32_0 : i32, i32
  }
  func.func @transform_9(%arg0: i32) -> (i32, i32) {
    %c0_i32 = arith.constant 0 : i32
    %c0_i32_0 = arith.constant 0 : i32
    %c0_i32_1 = arith.constant 0 : i32
    return %c0_i32, %c0_i32_0 : i32, i32
  }
  func.func @transform_10(%arg0: i32) -> (i32, i32) {
    %c0_i32 = arith.constant 0 : i32
    %c0_i32_0 = arith.constant 0 : i32
    %c0_i32_1 = arith.constant 0 : i32
    return %c0_i32, %c0_i32_0 : i32, i32
  }
  func.func @transform_11(%arg0: i32) -> (i32, i32) {
    %c0_i32 = arith.constant 0 : i32
    %c0_i32_0 = arith.constant 0 : i32
    return %arg0, %c0_i32 : i32, i32
  }
}

</mosaic_0001>

<llo_original>
// kernel: cnn_model_forward.1
$region0: #{cnn_model_forward.1}
  #allocation0 [shape = 'u32[]', space=smem, size = 0x4, offset = 0x4, fixed_abs, tag = 'smem constant byte address 0x4 - core index']
  #allocation1 [shape = 'u32[144,128]{1,0:T(1,128)}', space=vmem, size = 0x12000, scoped, tag = 'internal scratch']
  %s0 = inlined_call_operand.vmem [shape: f32[16,16], index: 0, kind: input, shape index: {}]
  %s1 = inlined_call_operand.vmem [shape: f32[16,8], index: 1, kind: input, shape index: {}]
  %s2 = inlined_call_operand.vmem [shape: f32[5,32], index: 2, kind: input, shape index: {}]
  %s3 = inlined_call_operand.vmem [shape: f32[1,32], index: 3, kind: input, shape index: {}]
  %s4 = inlined_call_operand.vmem [shape: f32[96,32], index: 4, kind: input, shape index: {}]
  %s5 = inlined_call_operand.vmem [shape: f32[1,32], index: 5, kind: input, shape index: {}]
  %s6 = inlined_call_operand.vmem [shape: f32[4,32,64], index: 6, kind: input, shape index: {}]
  %s7 = inlined_call_operand.vmem [shape: f32[8,64], index: 7, kind: input, shape index: {}]
  %s8 = inlined_call_operand.vmem [shape: f32[1,64], index: 8, kind: input, shape index: {}]
  %s9 = inlined_call_operand.vmem [shape: f32[64,32], index: 9, kind: input, shape index: {}]
  %s10 = inlined_call_operand.vmem [shape: f32[1,32], index: 10, kind: input, shape index: {}]
  %s11 = inlined_call_operand.hbm [shape: f32[16,32], index: 11, kind: output, shape index: {}]
  %s12 = sld [smem:[#allocation0]]
  $region77: #{cnn_model_forward.1} parent=0
    _
  %s14 = ssub.s32 1, %s12
  %s15 = scalar_select 0, %s14, %s12
  $region1: #{cnn_model_forward.1} parent=0
    #allocation2 [shape = 'u8[8192]{0}', space=vmem, size = 0x2000, scoped, tag = 'output window, operand 0']
    #allocation3 [shape = 's32[2]{0}', space=sflag, size = 0x8, scoped, tag = 'scoped memory for cnn_model_forward.1']
    %16 = vsyncpa [#allocation3], 0
    %s17 = scalar_lea.sflag [#allocation3], 1
    %18 = vsyncpa %s17, 0
    loop: start=0, step=1, limit=4
    $region2: #{cnn_model_forward.1} parent=1 // loop_pre_header
      _
    $region3: #{cnn_model_forward.1} parent=1 // loop_header
      %s20 = sphi 0, %s24
      %p21 = scmp.ge.s32.totalorder %s20, 4
      %s30 = sphi 0, %s32
      %s33 = sphi 0, %s30
      %s34 = sphi 0, %s33
      %s50 = sphi 0, %s34
      %s56 = sphi 0, %s58
      %s59 = sphi 0, %s56
      %s60 = sphi 0, %s59
      %s76 = sphi 0, %s60
      %s80 = sphi 0, %s80
      %s82 = sphi 0, %s80
      %s83 = sphi 0, %s82
      %s97 = sphi 0, %s83
      %s101 = sphi 0, %s101
      %s103 = sphi 0, %s101
      %s104 = sphi 0, %s103
      %s118 = sphi 0, %s104
      %s122 = sphi 0, %s122
      %s124 = sphi 0, %s122
      %s125 = sphi 0, %s124
      %s139 = sphi 0, %s125
      %s143 = sphi 0, %s143
      %s145 = sphi 0, %s143
      %s146 = sphi 0, %s145
      %s160 = sphi 0, %s146
      %s164 = sphi 0, %s164
      %s166 = sphi 0, %s164
      %s167 = sphi 0, %s166
      %s181 = sphi 0, %s167
      %s185 = sphi 0, %s185
      %s187 = sphi 0, %s185
      %s188 = sphi 0, %s187
      %s202 = sphi 0, %s188
      %s206 = sphi 0, %s206
      %s208 = sphi 0, %s206
      %s209 = sphi 0, %s208
      %s223 = sphi 0, %s209
      %s227 = sphi 0, %s227
      %s229 = sphi 0, %s227
      %s230 = sphi 0, %s229
      %s244 = sphi 0, %s230
      %s248 = sphi 0, %s248
      %s250 = sphi 0, %s248
      %s251 = sphi 0, %s250
      %s265 = sphi 0, %s251
      %s271 = sphi 0, %s273
      %s274 = sphi 0, %s271
      %s275 = sphi 0, %s274
      %s291 = sphi 0, %s275
    $region4: #{cnn_model_forward.1} parent=1 // loop_header_branch
      %23 = sbr.rel (%p21) target = $region8
    $region5: #{cnn_model_forward.1} parent=1 // loop_body
      %s25 = ssub.s32 %s20, 1
      %s26 = ssub.s32 %s20, 2
      %s27 = sadd.s32 %s20, 1
      %s28 = ssub.s32 %s20, %s27
      %p29 = scmp.eq.s32.totalorder %s28, 0
      %s31 = sadd.s32 %s30, 1
      %s32 = scalar_select %p29, %s30, %s31
      %p35 = pneg %p29
      %p36 = scmp.eq.s32.totalorder %s20, 1
      %p37 = por %p35, %p36
      %p38 = scmp.ne.s32.totalorder %s30, %s33
      %p39 = scmp.eq.s32.totalorder %s20, 0
      %p40 = por %p38, %p39
      %p41 = scmp.ne.s32.totalorder %s30, %s33
      %p42 = scmp.eq.s32.totalorder %s25, 1
      %p43 = por %p41, %p42
      %p44 = scmp.ne.s32.totalorder %s33, %s34
      %p45 = scmp.eq.s32.totalorder %s25, 0
      %p46 = por %p44, %p45
      %p47 = scmp.ne.s32.totalorder %s33, %s34
      %p48 = scmp.eq.s32.totalorder %s26, 1
      %p49 = por %p47, %p48
      %p51 = scmp.ne.s32.totalorder %s34, %s50
      %p52 = scmp.eq.s32.totalorder %s26, 0
      %p53 = por %p51, %p52
      %s54 = ssub.s32 %s20, %s27
      %p55 = scmp.eq.s32.totalorder %s54, 0
      %s57 = sadd.s32 %s56, 1
      %s58 = scalar_select %p55, %s56, %s57
      %p61 = pneg %p55
      %p62 = scmp.eq.s32.totalorder %s20, 1
      %p63 = por %p61, %p62
      %p64 = scmp.ne.s32.totalorder %s56, %s59
      %p65 = scmp.eq.s32.totalorder %s20, 0
      %p66 = por %p64, %p65
      %p67 = scmp.ne.s32.totalorder %s56, %s59
      %p68 = scmp.eq.s32.totalorder %s25, 1
      %p69 = por %p67, %p68
      %p70 = scmp.ne.s32.totalorder %s59, %s60
      %p71 = scmp.eq.s32.totalorder %s25, 0
      %p72 = por %p70, %p71
      %p73 = scmp.ne.s32.totalorder %s59, %s60
      %p74 = scmp.eq.s32.totalorder %s26, 1
      %p75 = por %p73, %p74
      %p77 = scmp.ne.s32.totalorder %s60, %s76
      %p78 = scmp.eq.s32.totalorder %s26, 0
      %p79 = por %p77, %p78
      %s81 = sadd.s32 %s80, 1
      %p84 = scmp.eq.s32.totalorder %s20, 1
      %p85 = scmp.ne.s32.totalorder %s80, %s82
      %p86 = scmp.eq.s32.totalorder %s20, 0
      %p87 = por %p85, %p86
      %p88 = scmp.ne.s32.totalorder %s80, %s82
      %p89 = scmp.eq.s32.totalorder %s25, 1
      %p90 = por %p88, %p89
      %p91 = scmp.ne.s32.totalorder %s82, %s83
      %p92 = scmp.eq.s32.totalorder %s25, 0
      %p93 = por %p91, %p92
      %p94 = scmp.ne.s32.totalorder %s82, %s83
      %p95 = scmp.eq.s32.totalorder %s26, 1
      %p96 = por %p94, %p95
      %p98 = scmp.ne.s32.totalorder %s83, %s97
      %p99 = scmp.eq.s32.totalorder %s26, 0
      %p100 = por %p98, %p99
      %s102 = sadd.s32 %s101, 1
      %p105 = scmp.eq.s32.totalorder %s20, 1
      %p106 = scmp.ne.s32.totalorder %s101, %s103
      %p107 = scmp.eq.s32.totalorder %s20, 0
      %p108 = por %p106, %p107
      %p109 = scmp.ne.s32.totalorder %s101, %s103
      %p110 = scmp.eq.s32.totalorder %s25, 1
      %p111 = por %p109, %p110
      %p112 = scmp.ne.s32.totalorder %s103, %s104
      %p113 = scmp.eq.s32.totalorder %s25, 0
      %p114 = por %p112, %p113
      %p115 = scmp.ne.s32.totalorder %s103, %s104
      %p116 = scmp.eq.s32.totalorder %s26, 1
      %p117 = por %p115, %p116
      %p119 = scmp.ne.s32.totalorder %s104, %s118
      %p120 = scmp.eq.s32.totalorder %s26, 0
      %p121 = por %p119, %p120
      %s123 = sadd.s32 %s122, 1
      %p126 = scmp.eq.s32.totalorder %s20, 1
      %p127 = scmp.ne.s32.totalorder %s122, %s124
      %p128 = scmp.eq.s32.totalorder %s20, 0
      %p129 = por %p127, %p128
      %p130 = scmp.ne.s32.totalorder %s122, %s124
      %p131 = scmp.eq.s32.totalorder %s25, 1
      %p132 = por %p130, %p131
      %p133 = scmp.ne.s32.totalorder %s124, %s125
      %p134 = scmp.eq.s32.totalorder %s25, 0
      %p135 = por %p133, %p134
      %p136 = scmp.ne.s32.totalorder %s124, %s125
      %p137 = scmp.eq.s32.totalorder %s26, 1
      %p138 = por %p136, %p137
      %p140 = scmp.ne.s32.totalorder %s125, %s139
      %p141 = scmp.eq.s32.totalorder %s26, 0
      %p142 = por %p140, %p141
      %s144 = sadd.s32 %s143, 1
      %p147 = scmp.eq.s32.totalorder %s20, 1
      %p148 = scmp.ne.s32.totalorder %s143, %s145
      %p149 = scmp.eq.s32.totalorder %s20, 0
      %p150 = por %p148, %p149
      %p151 = scmp.ne.s32.totalorder %s143, %s145
      %p152 = scmp.eq.s32.totalorder %s25, 1
      %p153 = por %p151, %p152
      %p154 = scmp.ne.s32.totalorder %s145, %s146
      %p155 = scmp.eq.s32.totalorder %s25, 0
      %p156 = por %p154, %p155
      %p157 = scmp.ne.s32.totalorder %s145, %s146
      %p158 = scmp.eq.s32.totalorder %s26, 1
      %p159 = por %p157, %p158
      %p161 = scmp.ne.s32.totalorder %s146, %s160
      %p162 = scmp.eq.s32.totalorder %s26, 0
      %p163 = por %p161, %p162
      %s165 = sadd.s32 %s164, 1
      %p168 = scmp.eq.s32.totalorder %s20, 1
      %p169 = scmp.ne.s32.totalorder %s164, %s166
      %p170 = scmp.eq.s32.totalorder %s20, 0
      %p171 = por %p169, %p170
      %p172 = scmp.ne.s32.totalorder %s164, %s166
      %p173 = scmp.eq.s32.totalorder %s25, 1
      %p174 = por %p172, %p173
      %p175 = scmp.ne.s32.totalorder %s166, %s167
      %p176 = scmp.eq.s32.totalorder %s25, 0
      %p177 = por %p175, %p176
      %p178 = scmp.ne.s32.totalorder %s166, %s167
      %p179 = scmp.eq.s32.totalorder %s26, 1
      %p180 = por %p178, %p179
      %p182 = scmp.ne.s32.totalorder %s167, %s181
      %p183 = scmp.eq.s32.totalorder %s26, 0
      %p184 = por %p182, %p183
      %s186 = sadd.s32 %s185, 1
      %p189 = scmp.eq.s32.totalorder %s20, 1
      %p190 = scmp.ne.s32.totalorder %s185, %s187
      %p191 = scmp.eq.s32.totalorder %s20, 0
      %p192 = por %p190, %p191
      %p193 = scmp.ne.s32.totalorder %s185, %s187
      %p194 = scmp.eq.s32.totalorder %s25, 1
      %p195 = por %p193, %p194
      %p196 = scmp.ne.s32.totalorder %s187, %s188
      %p197 = scmp.eq.s32.totalorder %s25, 0
      %p198 = por %p196, %p197
      %p199 = scmp.ne.s32.totalorder %s187, %s188
      %p200 = scmp.eq.s32.totalorder %s26, 1
      %p201 = por %p199, %p200
      %p203 = scmp.ne.s32.totalorder %s188, %s202
      %p204 = scmp.eq.s32.totalorder %s26, 0
      %p205 = por %p203, %p204
      %s207 = sadd.s32 %s206, 1
      %p210 = scmp.eq.s32.totalorder %s20, 1
      %p211 = scmp.ne.s32.totalorder %s206, %s208
      %p212 = scmp.eq.s32.totalorder %s20, 0
      %p213 = por %p211, %p212
      %p214 = scmp.ne.s32.totalorder %s206, %s208
      %p215 = scmp.eq.s32.totalorder %s25, 1
      %p216 = por %p214, %p215
      %p217 = scmp.ne.s32.totalorder %s208, %s209
      %p218 = scmp.eq.s32.totalorder %s25, 0
      %p219 = por %p217, %p218
      %p220 = scmp.ne.s32.totalorder %s208, %s209
      %p221 = scmp.eq.s32.totalorder %s26, 1
      %p222 = por %p220, %p221
      %p224 = scmp.ne.s32.totalorder %s209, %s223
      %p225 = scmp.eq.s32.totalorder %s26, 0
      %p226 = por %p224, %p225
      %s228 = sadd.s32 %s227, 1
      %p231 = scmp.eq.s32.totalorder %s20, 1
      %p232 = scmp.ne.s32.totalorder %s227, %s229
      %p233 = scmp.eq.s32.totalorder %s20, 0
      %p234 = por %p232, %p233
      %p235 = scmp.ne.s32.totalorder %s227, %s229
      %p236 = scmp.eq.s32.totalorder %s25, 1
      %p237 = por %p235, %p236
      %p238 = scmp.ne.s32.totalorder %s229, %s230
      %p239 = scmp.eq.s32.totalorder %s25, 0
      %p240 = por %p238, %p239
      %p241 = scmp.ne.s32.totalorder %s229, %s230
      %p242 = scmp.eq.s32.totalorder %s26, 1
      %p243 = por %p241, %p242
      %p245 = scmp.ne.s32.totalorder %s230, %s244
      %p246 = scmp.eq.s32.totalorder %s26, 0
      %p247 = por %p245, %p246
      %s249 = sadd.s32 %s248, 1
      %p252 = scmp.eq.s32.totalorder %s20, 1
      %p253 = scmp.ne.s32.totalorder %s248, %s250
      %p254 = scmp.eq.s32.totalorder %s20, 0
      %p255 = por %p253, %p254
      %p256 = scmp.ne.s32.totalorder %s248, %s250
      %p257 = scmp.eq.s32.totalorder %s25, 1
      %p258 = por %p256, %p257
      %p259 = scmp.ne.s32.totalorder %s250, %s251
      %p260 = scmp.eq.s32.totalorder %s25, 0
      %p261 = por %p259, %p260
      %p262 = scmp.ne.s32.totalorder %s250, %s251
      %p263 = scmp.eq.s32.totalorder %s26, 1
      %p264 = por %p262, %p263
      %p266 = scmp.ne.s32.totalorder %s251, %s265
      %p267 = scmp.eq.s32.totalorder %s26, 0
      %p268 = por %p266, %p267
      %s269 = ssub.s32 %s20, %s27
      %p270 = scmp.eq.s32.totalorder %s269, 0
      %s272 = sadd.s32 %s271, 1
      %s273 = scalar_select %p270, %s271, %s272
      %p276 = pneg %p270
      %p277 = scmp.eq.s32.totalorder %s20, 1
      %p278 = por %p276, %p277
      %p279 = scmp.ne.s32.totalorder %s271, %s274
      %p280 = scmp.eq.s32.totalorder %s20, 0
      %p281 = por %p279, %p280
      %p282 = scmp.ne.s32.totalorder %s271, %s274
      %p283 = scmp.eq.s32.totalorder %s25, 1
      %p284 = por %p282, %p283
      %p285 = scmp.ne.s32.totalorder %s274, %s275
      %p286 = scmp.eq.s32.totalorder %s25, 0
      %p287 = por %p285, %p286
      %p288 = scmp.ne.s32.totalorder %s274, %s275
      %p289 = scmp.eq.s32.totalorder %s26, 1
      %p290 = por %p288, %p289
      %p292 = scmp.ne.s32.totalorder %s275, %s291
      %p293 = scmp.eq.s32.totalorder %s26, 0
      %p294 = por %p292, %p293
      %p295 = scmp.le.s32.totalorder 1, %s20
      %p296 = scmp.lt.s32.totalorder %s20, 3
      %p297 = pnand %p295, %p296
      %p298 = pneg %p297
      // Predicated region
      $region9: #{cnn_model_forward.1} parent=5 // pred_check
        _
      $region10: #{cnn_model_forward.1} parent=5 // pred_check_branch
        %300 = sbr.rel (%p297) target = $region12
      $region11: #{cnn_model_forward.1} parent=5 // pred_region
        %s301 = ssub.s32 %s20, 1
        // Predicated region
        $region13: #{cnn_model_forward.1} parent=11 // pred_check
          %p302 = pneg %p93
        $region14: #{cnn_model_forward.1} parent=11 // pred_check_branch
          %304 = sbr.rel (%p302) target = $region16
        $region15: #{cnn_model_forward.1} parent=11 // pred_region
          _
        $region16: #{cnn_model_forward.1} parent=11 // pred_fallthru
          _
        // Predicated region
        $region17: #{cnn_model_forward.1} parent=11 // pred_check
          %p305 = pneg %p114
        $region18: #{cnn_model_forward.1} parent=11 // pred_check_branch
          %307 = sbr.rel (%p305) target = $region20
        $region19: #{cnn_model_forward.1} parent=11 // pred_region
          _
        $region20: #{cnn_model_forward.1} parent=11 // pred_fallthru
          _
        // Predicated region
        $region21: #{cnn_model_forward.1} parent=11 // pred_check
          %p308 = pneg %p135
        $region22: #{cnn_model_forward.1} parent=11 // pred_check_branch
          %310 = sbr.rel (%p308) target = $region24
        $region23: #{cnn_model_forward.1} parent=11 // pred_region
          _
        $region24: #{cnn_model_forward.1} parent=11 // pred_fallthru
          _
        // Predicated region
        $region25: #{cnn_model_forward.1} parent=11 // pred_check
          %p311 = pneg %p156
        $region26: #{cnn_model_forward.1} parent=11 // pred_check_branch
          %313 = sbr.rel (%p311) target = $region28
        $region27: #{cnn_model_forward.1} parent=11 // pred_region
          _
        $region28: #{cnn_model_forward.1} parent=11 // pred_fallthru
          _
        // Predicated region
        $region29: #{cnn_model_forward.1} parent=11 // pred_check
          %p314 = pneg %p177
        $region30: #{cnn_model_forward.1} parent=11 // pred_check_branch
          %316 = sbr.rel (%p314) target = $region32
        $region31: #{cnn_model_forward.1} parent=11 // pred_region
          _
        $region32: #{cnn_model_forward.1} parent=11 // pred_fallthru
          _
        // Predicated region
        $region33: #{cnn_model_forward.1} parent=11 // pred_check
          %p317 = pneg %p198
        $region34: #{cnn_model_forward.1} parent=11 // pred_check_branch
          %319 = sbr.rel (%p317) target = $region36
        $region35: #{cnn_model_forward.1} parent=11 // pred_region
          _
        $region36: #{cnn_model_forward.1} parent=11 // pred_fallthru
          _
        // Predicated region
        $region37: #{cnn_model_forward.1} parent=11 // pred_check
          %p320 = pneg %p219
        $region38: #{cnn_model_forward.1} parent=11 // pred_check_branch
          %322 = sbr.rel (%p320) target = $region40
        $region39: #{cnn_model_forward.1} parent=11 // pred_region
          _
        $region40: #{cnn_model_forward.1} parent=11 // pred_fallthru
          _
        // Predicated region
        $region41: #{cnn_model_forward.1} parent=11 // pred_check
          %p323 = pneg %p240
        $region42: #{cnn_model_forward.1} parent=11 // pred_check_branch
          %325 = sbr.rel (%p323) target = $region44
        $region43: #{cnn_model_forward.1} parent=11 // pred_region
          _
        $region44: #{cnn_model_forward.1} parent=11 // pred_fallthru
          _
        // Predicated region
        $region45: #{cnn_model_forward.1} parent=11 // pred_check
          %p326 = pneg %p261
        $region46: #{cnn_model_forward.1} parent=11 // pred_check_branch
          %328 = sbr.rel (%p326) target = $region48
        $region47: #{cnn_model_forward.1} parent=11 // pred_region
          _
        $region48: #{cnn_model_forward.1} parent=11 // pred_fallthru
          _
      $region12: #{cnn_model_forward.1} parent=5 // pred_fallthru
        _
      %p329 = scmp.lt.s32.totalorder %s20, 2
      // Predicated region
      $region49: #{cnn_model_forward.1} parent=5 // pred_check
        %p330 = pneg %p329
      $region50: #{cnn_model_forward.1} parent=5 // pred_check_branch
        %332 = sbr.rel (%p330) target = $region52
      $region51: #{cnn_model_forward.1} parent=5 // pred_region
        // Predicated region
        $region53: #{cnn_model_forward.1} parent=51 // pred_check
          %p333 = pneg %p40
        $region54: #{cnn_model_forward.1} parent=51 // pred_check_branch
          %335 = sbr.rel (%p333) target = $region56
        $region55: #{cnn_model_forward.1} parent=51 // pred_region
          %p336 = scmp.lt.s32.totalorder %s20, 1
          %s337 = scalar_select %p336, %s20, 1
          %s338 = smul.addr %s337, 8
          %s339 = scalar_lea.vmem %s0, %s338
        $region56: #{cnn_model_forward.1} parent=51 // pred_fallthru
          _
        // Predicated region
        $region57: #{cnn_model_forward.1} parent=51 // pred_check
          %p340 = pneg %p66
        $region58: #{cnn_model_forward.1} parent=51 // pred_check_branch
          %342 = sbr.rel (%p340) target = $region60
        $region59: #{cnn_model_forward.1} parent=51 // pred_region
          %p343 = scmp.lt.s32.totalorder %s20, 1
          %s344 = scalar_select %p343, %s20, 1
          %s345 = smul.addr %s344, 8
          %s346 = scalar_lea.vmem %s1, %s345
        $region60: #{cnn_model_forward.1} parent=51 // pred_fallthru
          _
      $region52: #{cnn_model_forward.1} parent=5 // pred_fallthru
        _
      %p347 = scmp.le.s32.totalorder 1, %s20
      %p348 = scmp.lt.s32.totalorder %s20, 3
      %p349 = pnand %p347, %p348
      %p350 = pneg %p349
      // Predicated region
      $region61: #{cnn_model_forward.1} parent=5 // pred_check
        _
      $region62: #{cnn_model_forward.1} parent=5 // pred_check_branch
        %352 = sbr.rel (%p349) target = $region64
      $region63: #{cnn_model_forward.1} parent=5 // pred_region
        %s353 = ssub.s32 %s20, 1
        %p354 = scmp.lt.s32.totalorder %s25, 1
        %s355 = scalar_select %p354, %s25, 1
        %s356 = smul.addr %s355, 8
        %s357 = scalar_lea.vmem %s0, %s356
        %p358 = pneg %p46
        %p359 = pneg %p43
        %p360 = scmp.lt.s32.totalorder %s25, 1
        %s361 = scalar_select %p360, %s25, 1
        %s362 = smul.addr %s361, 8
        %s363 = scalar_lea.vmem %s1, %s362
        %p364 = pneg %p72
        %p365 = pneg %p69
        %p366 = pneg %p93
        %p367 = pneg %p90
        %p368 = pneg %p114
        %p369 = pneg %p111
        %p370 = pneg %p135
        %p371 = pneg %p132
        %p372 = pneg %p156
        %p373 = pneg %p153
        %p374 = pneg %p177
        %p375 = pneg %p174
        %p376 = pneg %p198
        %p377 = pneg %p195
        %p378 = pneg %p219
        %p379 = pneg %p216
        %p380 = pneg %p240
        %p381 = pneg %p237
        %p382 = pneg %p261
        %p383 = pneg %p258
        %p384 = pneg %p287
        %p385 = pneg %p284
        %s386 = sand.u32 %s274, 1
        %s387 = scalar_lea.sflag [#allocation3], %s386
        %s388 = sand.u32 %s274, 1
        %s389 = smul.addr %s388, 8
        %s390 = scalar_lea.vmem [#allocation2], %s389
        %p391 = scmp.lt.s32.totalorder %s25, 1
        %s392 = scalar_select %p391, %s25, 1
        %s393 = smul.addr %s392, 8
        %s394 = scalar_lea.vmem %s0, %s393
        %p395 = scmp.lt.s32.totalorder %s25, 1
        %s396 = scalar_select %p395, %s25, 1
        %s397 = smul.addr %s396, 8
        %s398 = scalar_lea.vmem %s1, %s397
        %v399 = vld [vmem:[%s394] sm:$0xff]
        %v400 = vld [vmem:[%s2] sm:$0x1f]
        %v401 = vld [vmem:[%s3] sm:$0x1]
        %403 = vset.pattern.permute.xlu0 14
        %404 = vperm.xlu0 %403, %v399
        %v405 = vpop.permute.xlu0 %404
        %v407 = vlaneseq
        %v408 = vshrl.u32 %v407, 7
        %v409 = vsub.s32 0, %v408
        %v410 = vrot.slane %v400, %v409
        %v411 = vmul.f32 %v405, %v410
        %v413 = vlaneseq
        %v414 = vshrl.u32 %v413, 7
        %v415 = vsub.s32 0, %v414
        %v416 = vrot.slane %v401, %v415
        %v418 = vadd.f32 %v416, %v411
        %419 = vset.pattern.permute.xlu0 15
        %420 = vperm.xlu0 %419, %v399
        %v421 = vpop.permute.xlu0 %420
        %v423 = vlaneseq
        %v424 = vshrl.u32 %v423, 7
        %v425 = vsub.s32 1, %v424
        %v426 = vrot.slane %v400, %v425
        %v427 = vmul.f32 %v421, %v426
        %v428 = vadd.f32 %v418, %v427
        %429 = vset.pattern.permute.xlu0 0
        %430 = vperm.xlu0 %429, %v399
        %v431 = vpop.permute.xlu0 %430
        %v433 = vlaneseq
        %v434 = vshrl.u32 %v433, 7
        %v435 = vsub.s32 2, %v434
        %v436 = vrot.slane %v400, %v435
        %v437 = vmul.f32 %v431, %v436
        %v438 = vadd.f32 %v428, %v437
        %439 = vset.pattern.permute.xlu0 1
        %440 = vperm.xlu0 %439, %v399
        %v441 = vpop.permute.xlu0 %440
        %v443 = vlaneseq
        %v444 = vshrl.u32 %v443, 7
        %v445 = vsub.s32 3, %v444
        %v446 = vrot.slane %v400, %v445
        %v447 = vmul.f32 %v441, %v446
        %v448 = vadd.f32 %v438, %v447
        %449 = vset.pattern.permute.xlu0 2
        %450 = vperm.xlu0 %449, %v399
        %v451 = vpop.permute.xlu0 %450
        %v453 = vlaneseq
        %v454 = vshrl.u32 %v453, 7
        %v455 = vsub.s32 4, %v454
        %v456 = vrot.slane %v400, %v455
        %v457 = vmul.f32 %v451, %v456
        %v458 = vadd.f32 %v448, %v457
        %v459 = vmax.f32 %v458, 0.0
        %v460 = vmul.f32 %v431, %v410
        %v461 = vadd.f32 %v416, %v460
        %v462 = vmul.f32 %v441, %v426
        %v463 = vadd.f32 %v461, %v462
        %v464 = vmul.f32 %v451, %v436
        %v465 = vadd.f32 %v463, %v464
        %466 = vset.pattern.permute.xlu0 3
        %467 = vperm.xlu0 %466, %v399
        %v468 = vpop.permute.xlu0 %467
        %v470 = vmul.f32 %v468, %v446
        %v471 = vadd.f32 %v465, %v470
        %472 = vset.pattern.permute.xlu0 4
        %473 = vperm.xlu0 %472, %v399
        %v474 = vpop.permute.xlu0 %473
        %v476 = vmul.f32 %v474, %v456
        %v477 = vadd.f32 %v471, %v476
        %v478 = vmax.f32 %v477, 0.0
        %v479 = vmul.f32 %v451, %v410
        %v480 = vadd.f32 %v416, %v479
        %v481 = vmul.f32 %v468, %v426
        %v482 = vadd.f32 %v480, %v481
        %v483 = vmul.f32 %v474, %v436
        %v484 = vadd.f32 %v482, %v483
        %485 = vset.pattern.permute.xlu0 5
        %486 = vperm.xlu0 %485, %v399
        %v487 = vpop.permute.xlu0 %486
        %v489 = vmul.f32 %v487, %v446
        %v490 = vadd.f32 %v484, %v489
        %491 = vset.pattern.permute.xlu0 6
        %492 = vperm.xlu0 %491, %v399
        %v493 = vpop.permute.xlu0 %492
        %v495 = vmul.f32 %v493, %v456
        %v496 = vadd.f32 %v490, %v495
        %v497 = vmax.f32 %v496, 0.0
        %v498 = vmul.f32 %v474, %v410
        %v499 = vadd.f32 %v416, %v498
        %v500 = vmul.f32 %v487, %v426
        %v501 = vadd.f32 %v499, %v500
        %v502 = vmul.f32 %v493, %v436
        %v503 = vadd.f32 %v501, %v502
        %504 = vset.pattern.permute.xlu0 7
        %505 = vperm.xlu0 %504, %v399
        %v506 = vpop.permute.xlu0 %505
        %v508 = vmul.f32 %v506, %v446
        %v509 = vadd.f32 %v503, %v508
        %510 = vset.pattern.permute.xlu0 8
        %511 = vperm.xlu0 %510, %v399
        %v512 = vpop.permute.xlu0 %511
        %v514 = vmul.f32 %v512, %v456
        %v515 = vadd.f32 %v509, %v514
        %v516 = vmax.f32 %v515, 0.0
        %v517 = vmul.f32 %v493, %v410
        %v518 = vadd.f32 %v416, %v517
        %v519 = vmul.f32 %v506, %v426
        %v520 = vadd.f32 %v518, %v519
        %v521 = vmul.f32 %v512, %v436
        %v522 = vadd.f32 %v520, %v521
        %523 = vset.pattern.permute.xlu0 9
        %524 = vperm.xlu0 %523, %v399
        %v525 = vpop.permute.xlu0 %524
        %v527 = vmul.f32 %v525, %v446
        %v528 = vadd.f32 %v522, %v527
        %529 = vset.pattern.permute.xlu0 10
        %530 = vperm.xlu0 %529, %v399
        %v531 = vpop.permute.xlu0 %530
        %v533 = vmul.f32 %v531, %v456
        %v534 = vadd.f32 %v528, %v533
        %v535 = vmax.f32 %v534, 0.0
        %v536 = vmul.f32 %v512, %v410
        %v537 = vadd.f32 %v416, %v536
        %v538 = vmul.f32 %v525, %v426
        %v539 = vadd.f32 %v537, %v538
        %v540 = vmul.f32 %v531, %v436
        %v541 = vadd.f32 %v539, %v540
        %542 = vset.pattern.permute.xlu0 11
        %543 = vperm.xlu0 %542, %v399
        %v544 = vpop.permute.xlu0 %543
        %v546 = vmul.f32 %v544, %v446
        %v547 = vadd.f32 %v541, %v546
        %548 = vset.pattern.permute.xlu0 12
        %549 = vperm.xlu0 %548, %v399
        %v550 = vpop.permute.xlu0 %549
        %v552 = vmul.f32 %v550, %v456
        %v553 = vadd.f32 %v547, %v552
        %v554 = vmax.f32 %v553, 0.0
        %v555 = vmul.f32 %v531, %v410
        %v556 = vadd.f32 %v416, %v555
        %v557 = vmul.f32 %v544, %v426
        %v558 = vadd.f32 %v556, %v557
        %v559 = vmul.f32 %v550, %v436
        %v560 = vadd.f32 %v558, %v559
        %561 = vset.pattern.permute.xlu0 13
        %562 = vperm.xlu0 %561, %v399
        %v563 = vpop.permute.xlu0 %562
        %v565 = vmul.f32 %v563, %v446
        %v566 = vadd.f32 %v560, %v565
        %v567 = vmul.f32 %v405, %v456
        %v568 = vadd.f32 %v566, %v567
        %v569 = vmax.f32 %v568, 0.0
        %v570 = vmul.f32 %v550, %v410
        %v571 = vadd.f32 %v416, %v570
        %v572 = vmul.f32 %v563, %v426
        %v573 = vadd.f32 %v571, %v572
        %v574 = vmul.f32 %v405, %v436
        %v575 = vadd.f32 %v573, %v574
        %v576 = vmul.f32 %v421, %v446
        %v577 = vadd.f32 %v575, %v576
        %v578 = vmul.f32 %v431, %v456
        %v579 = vadd.f32 %v577, %v578
        %v580 = vmax.f32 %v579, 0.0
        %v581 = vld [vmem:[%s4] sm:$0xff]
        %v582 = vld [vmem:[%s4 + $0x8] sm:$0xff]
        %v583 = vld [vmem:[%s4 + $0x10] sm:$0xff]
        %v584 = vld [vmem:[%s4 + $0x18] sm:$0xff]
        %v585 = vld [vmem:[%s4 + $0x20] sm:$0xff]
        %v586 = vld [vmem:[%s4 + $0x28] sm:$0xff]
        %v587 = vld [vmem:[%s4 + $0x30] sm:$0xff]
        %v588 = vld [vmem:[%s4 + $0x38] sm:$0xff]
        %v589 = vld [vmem:[%s4 + $0x40] sm:$0xff]
        %v590 = vld [vmem:[%s4 + $0x48] sm:$0xff]
        %v591 = vld [vmem:[%s4 + $0x50] sm:$0xff]
        %v592 = vld [vmem:[%s4 + $0x58] sm:$0xff]
        %v593 = vld [vmem:[%s5] sm:$0x1]
        %v594 = vld [vmem:[%s398] sm:$0xff]
        %v595 = vld [vmem:[%s7] sm:$0xff]
        %v596 = vld [vmem:[%s8] sm:$0x1]
        %v598 = vlaneseq
        %v599 = vshrl.u32 %v598, 7
        %v600 = vsub.s32 0, %v599
        %v601 = vrot.slane %v596, %v600
        %vm603 = vcmask 64512
        %v605 = vsel %vm603, %v594, 0
        %607 = vmatprep.subr.mxu0 0.0
        %608 = vmatpush1.msra.mxu0 %v595
        %609 = vmatprep.subr.mxu0 0.0
        %610 = vmatpush1.msra.mxu0 0.0
        %611 = vmatprep.subr.mxu0 0.0
        %612 = vmatpush1.msra.mxu0 0.0
        %613 = vmatprep.subr.mxu0 0.0
        %614 = vmatpush1.msra.mxu0 0.0
        %615 = vmatprep.subr.mxu0 0.0
        %616 = vmatpush1.msra.mxu0 0.0
        %617 = vmatprep.subr.mxu0 0.0
        %618 = vmatpush1.msra.mxu0 0.0
        %619 = vmatprep.subr.mxu0 0.0
        %620 = vmatpush1.msra.mxu0 0.0
        %621 = vmatprep.subr.mxu0 0.0
        %622 = vmatpush1.msra.mxu0 0.0
        %623 = vmatprep.subr.mxu0 0.0
        %624 = vmatpush1.msra.mxu0 0.0
        %625 = vmatprep.subr.mxu0 0.0
        %626 = vmatpush1.msra.mxu0 0.0
        %627 = vmatprep.subr.mxu0 0.0
        %628 = vmatpush1.msra.mxu0 0.0
        %629 = vmatprep.subr.mxu0 0.0
        %630 = vmatpush1.msra.mxu0 0.0
        %631 = vmatprep.subr.mxu0 0.0
        %632 = vmatpush1.msra.mxu0 0.0
        %633 = vmatprep.subr.mxu0 0.0
        %634 = vmatpush1.msra.mxu0 0.0
        %635 = vmatprep.subr.mxu0 0.0
        %636 = vmatpush1.msra.mxu0 0.0
        %637 = vmatprep.subr.mxu0 0.0
        %638 = vmatpush1.msra.mxu0 0.0
        %639 = vmatprep.subr.mxu0 0.0
        %640 = vmatpush1.msra.mxu0 0.0
        %641 = vmatprep.subr.mxu0 0.0
        %642 = vmatpush1.msra.mxu0 0.0
        %643 = vmatprep.subr.mxu0 0.0
        %644 = vmatpush1.msra.mxu0 0.0
        %645 = vmatprep.subr.mxu0 0.0
        %646 = vmatpush1.msra.mxu0 0.0
        %647 = vmatprep.subr.mxu0 0.0
        %648 = vmatpush1.msra.mxu0 0.0
        %649 = vmatprep.subr.mxu0 0.0
        %650 = vmatpush1.msra.mxu0 0.0
        %651 = vmatprep.subr.mxu0 0.0
        %652 = vmatpush1.msra.mxu0 0.0
        %653 = vmatprep.subr.mxu0 0.0
        %654 = vmatpush1.msra.mxu0 0.0
        %655 = vmatprep.subr.mxu0 0.0
        %656 = vmatpush1.msra.mxu0 0.0
        %657 = vmatprep.subr.mxu0 0.0
        %658 = vmatpush1.msra.mxu0 0.0
        %659 = vmatprep.subr.mxu0 0.0
        %660 = vmatpush1.msra.mxu0 0.0
        %661 = vmatprep.subr.mxu0 0.0
        %662 = vmatpush1.msra.mxu0 0.0
        %663 = vmatprep.subr.mxu0 0.0
        %664 = vmatpush1.msra.mxu0 0.0
        %665 = vmatprep.subr.mxu0 0.0
        %666 = vmatpush1.msra.mxu0 0.0
        %667 = vmatprep.subr.mxu0 0.0
        %668 = vmatpush1.msra.mxu0 0.0
        %669 = vmatprep.subr.mxu0 0.0
        %670 = vmatpush1.msra.mxu0 0.0
        %671 = vmatprep.mubr.f32.mxu0 0.0
        %672 = vmatmul.mubr.f32.gmra.mrb[0].mxu0 %v605
        %v673 = vpop.f32.mrb[0].mxu0
        %v674 = vadd.f32 %v601, %v673
        %v675 = vpop.f32.mrb[0].mxu0
        %676 = vdwg.mxu0
        %678 = vrot.lane.b32.xlu0 %v459, 32
        %v679 = vpop.permute.xlu0 %678
        %682 = vrot.lane.b32.xlu0 %v478, 64
        %v683 = vpop.permute.xlu0 %682
        %vm685 = vcmask 261120
        %v686 = vsel %vm685, %v580, %v679
        %vm687 = vcmask 523264
        %v688 = vsel %vm687, %v686, %v683
        %v690 = vlaneseq
        %v691 = vshrl.u32 %v690, 7
        %v692 = vsub.s32 0, %v691
        %v693 = vrot.slane %v593, %v692
        %vm695 = vcmask 785408
        %v697 = vsel %vm695, %v688, 0
        %699 = vmatprep.subr.mxu0 0.0
        %700 = vmatpush1.msra.mxu0 %v581
        %701 = vmatprep.subr.mxu0 0.0
        %702 = vmatpush1.msra.mxu0 %v582
        %703 = vmatprep.subr.mxu0 0.0
        %704 = vmatpush1.msra.mxu0 %v583
        %705 = vmatprep.subr.mxu0 0.0
        %706 = vmatpush1.msra.mxu0 %v584
        %707 = vmatprep.subr.mxu0 0.0
        %708 = vmatpush1.msra.mxu0 %v585
        %709 = vmatprep.subr.mxu0 0.0
        %710 = vmatpush1.msra.mxu0 %v586
        %711 = vmatprep.subr.mxu0 0.0
        %712 = vmatpush1.msra.mxu0 %v587
        %713 = vmatprep.subr.mxu0 0.0
        %714 = vmatpush1.msra.mxu0 %v588
        %715 = vmatprep.subr.mxu0 0.0
        %716 = vmatpush1.msra.mxu0 %v589
        %717 = vmatprep.subr.mxu0 0.0
        %718 = vmatpush1.msra.mxu0 %v590
        %719 = vmatprep.subr.mxu0 0.0
        %720 = vmatpush1.msra.mxu0 %v591
        %721 = vmatprep.subr.mxu0 0.0
        %722 = vmatpush1.msra.mxu0 %v592
        %723 = vmatprep.subr.mxu0 0.0
        %724 = vmatpush1.msra.mxu0 0.0
        %725 = vmatprep.subr.mxu0 0.0
        %726 = vmatpush1.msra.mxu0 0.0
        %727 = vmatprep.subr.mxu0 0.0
        %728 = vmatpush1.msra.mxu0 0.0
        %729 = vmatprep.subr.mxu0 0.0
        %730 = vmatpush1.msra.mxu0 0.0
        %731 = vmatprep.subr.mxu0 0.0
        %732 = vmatpush1.msra.mxu0 0.0
        %733 = vmatprep.subr.mxu0 0.0
        %734 = vmatpush1.msra.mxu0 0.0
        %735 = vmatprep.subr.mxu0 0.0
        %736 = vmatpush1.msra.mxu0 0.0
        %737 = vmatprep.subr.mxu0 0.0
        %738 = vmatpush1.msra.mxu0 0.0
        %739 = vmatprep.subr.mxu0 0.0
        %740 = vmatpush1.msra.mxu0 0.0
        %741 = vmatprep.subr.mxu0 0.0
        %742 = vmatpush1.msra.mxu0 0.0
        %743 = vmatprep.subr.mxu0 0.0
        %744 = vmatpush1.msra.mxu0 0.0
        %745 = vmatprep.subr.mxu0 0.0
        %746 = vmatpush1.msra.mxu0 0.0
        %747 = vmatprep.subr.mxu0 0.0
        %748 = vmatpush1.msra.mxu0 0.0
        %749 = vmatprep.subr.mxu0 0.0
        %750 = vmatpush1.msra.mxu0 0.0
        %751 = vmatprep.subr.mxu0 0.0
        %752 = vmatpush1.msra.mxu0 0.0
        %753 = vmatprep.subr.mxu0 0.0
        %754 = vmatpush1.msra.mxu0 0.0
        %755 = vmatprep.subr.mxu0 0.0
        %756 = vmatpush1.msra.mxu0 0.0
        %757 = vmatprep.subr.mxu0 0.0
        %758 = vmatpush1.msra.mxu0 0.0
        %759 = vmatprep.subr.mxu0 0.0
        %760 = vmatpush1.msra.mxu0 0.0
        %761 = vmatprep.subr.mxu0 0.0
        %762 = vmatpush1.msra.mxu0 0.0
        %763 = vmatprep.mubr.f32.mxu0 0.0
        %764 = vmatmul.mubr.f32.gmra.mrb[0].mxu0 %v697
        %v765 = vpop.f32.mrb[0].mxu0
        %v766 = vadd.f32 %v693, %v765
        %v767 = vpop.f32.mrb[0].mxu0
        %768 = vdwg.mxu0
        %v769 = vmax.f32 %v766, 0.0
        %v770 = vld [vmem:[%s6] sm:$0xff]
        %v771 = vld [vmem:[%s6 + $0x8] sm:$0xff]
        %v772 = vld [vmem:[%s6 + $0x10] sm:$0xff]
        %v773 = vld [vmem:[%s6 + $0x18] sm:$0xff]
        %v775 = vsel %vm685, %v769, 0
        %777 = vmatprep.subr.mxu0 0.0
        %778 = vmatpush1.msra.mxu0 %v770
        %779 = vmatprep.subr.mxu0 0.0
        %780 = vmatpush1.msra.mxu0 %v771
        %781 = vmatprep.subr.mxu0 0.0
        %782 = vmatpush1.msra.mxu0 %v772
        %783 = vmatprep.subr.mxu0 0.0
        %784 = vmatpush1.msra.mxu0 %v773
        %785 = vmatprep.subr.mxu0 0.0
        %786 = vmatpush1.msra.mxu0 0.0
        %787 = vmatprep.subr.mxu0 0.0
        %788 = vmatpush1.msra.mxu0 0.0
        %789 = vmatprep.subr.mxu0 0.0
        %790 = vmatpush1.msra.mxu0 0.0
        %791 = vmatprep.subr.mxu0 0.0
        %792 = vmatpush1.msra.mxu0 0.0
        %793 = vmatprep.subr.mxu0 0.0
        %794 = vmatpush1.msra.mxu0 0.0
        %795 = vmatprep.subr.mxu0 0.0
        %796 = vmatpush1.msra.mxu0 0.0
        %797 = vmatprep.subr.mxu0 0.0
        %798 = vmatpush1.msra.mxu0 0.0
        %799 = vmatprep.subr.mxu0 0.0
        %800 = vmatpush1.msra.mxu0 0.0
        %801 = vmatprep.subr.mxu0 0.0
        %802 = vmatpush1.msra.mxu0 0.0
        %803 = vmatprep.subr.mxu0 0.0
        %804 = vmatpush1.msra.mxu0 0.0
        %805 = vmatprep.subr.mxu0 0.0
        %806 = vmatpush1.msra.mxu0 0.0
        %807 = vmatprep.subr.mxu0 0.0
        %808 = vmatpush1.msra.mxu0 0.0
        %809 = vmatprep.subr.mxu0 0.0
        %810 = vmatpush1.msra.mxu0 0.0
        %811 = vmatprep.subr.mxu0 0.0
        %812 = vmatpush1.msra.mxu0 0.0
        %813 = vmatprep.subr.mxu0 0.0
        %814 = vmatpush1.msra.mxu0 0.0
        %815 = vmatprep.subr.mxu0 0.0
        %816 = vmatpush1.msra.mxu0 0.0
        %817 = vmatprep.subr.mxu0 0.0
        %818 = vmatpush1.msra.mxu0 0.0
        %819 = vmatprep.subr.mxu0 0.0
        %820 = vmatpush1.msra.mxu0 0.0
        %821 = vmatprep.subr.mxu0 0.0
        %822 = vmatpush1.msra.mxu0 0.0
        %823 = vmatprep.subr.mxu0 0.0
        %824 = vmatpush1.msra.mxu0 0.0
        %825 = vmatprep.subr.mxu0 0.0
        %826 = vmatpush1.msra.mxu0 0.0
        %827 = vmatprep.subr.mxu0 0.0
        %828 = vmatpush1.msra.mxu0 0.0
        %829 = vmatprep.subr.mxu0 0.0
        %830 = vmatpush1.msra.mxu0 0.0
        %831 = vmatprep.subr.mxu0 0.0
        %832 = vmatpush1.msra.mxu0 0.0
        %833 = vmatprep.subr.mxu0 0.0
        %834 = vmatpush1.msra.mxu0 0.0
        %835 = vmatprep.subr.mxu0 0.0
        %836 = vmatpush1.msra.mxu0 0.0
        %837 = vmatprep.subr.mxu0 0.0
        %838 = vmatpush1.msra.mxu0 0.0
        %839 = vmatprep.subr.mxu0 0.0
        %840 = vmatpush1.msra.mxu0 0.0
        %841 = vmatprep.mubr.f32.mxu0 0.0
        %842 = vmatmul.mubr.f32.gmra.mrb[0].mxu0 %v775
        %v843 = vpop.f32.mrb[0].mxu0
        %v844 = vadd.f32 0.0, %v843
        %v845 = vpop.f32.mrb[0].mxu0
        %846 = vdwg.mxu0
        %v847 = vadd.f32 %v674, %v844
        %849 = vrot.lane.b32.xlu0 %v497, 32
        %v850 = vpop.permute.xlu0 %849
        %853 = vrot.lane.b32.xlu0 %v516, 64
        %v854 = vpop.permute.xlu0 %853
        %v856 = vsel %vm685, %v478, %v850
        %v857 = vsel %vm687, %v856, %v854
        %v859 = vsel %vm695, %v857, 0
        %861 = vmatprep.subr.mxu0 0.0
        %862 = vmatpush1.msra.mxu0 %v581
        %863 = vmatprep.subr.mxu0 0.0
        %864 = vmatpush1.msra.mxu0 %v582
        %865 = vmatprep.subr.mxu0 0.0
        %866 = vmatpush1.msra.mxu0 %v583
        %867 = vmatprep.subr.mxu0 0.0
        %868 = vmatpush1.msra.mxu0 %v584
        %869 = vmatprep.subr.mxu0 0.0
        %870 = vmatpush1.msra.mxu0 %v585
        %871 = vmatprep.subr.mxu0 0.0
        %872 = vmatpush1.msra.mxu0 %v586
        %873 = vmatprep.subr.mxu0 0.0
        %874 = vmatpush1.msra.mxu0 %v587
        %875 = vmatprep.subr.mxu0 0.0
        %876 = vmatpush1.msra.mxu0 %v588
        %877 = vmatprep.subr.mxu0 0.0
        %878 = vmatpush1.msra.mxu0 %v589
        %879 = vmatprep.subr.mxu0 0.0
        %880 = vmatpush1.msra.mxu0 %v590
        %881 = vmatprep.subr.mxu0 0.0
        %882 = vmatpush1.msra.mxu0 %v591
        %883 = vmatprep.subr.mxu0 0.0
        %884 = vmatpush1.msra.mxu0 %v592
        %885 = vmatprep.subr.mxu0 0.0
        %886 = vmatpush1.msra.mxu0 0.0
        %887 = vmatprep.subr.mxu0 0.0
        %888 = vmatpush1.msra.mxu0 0.0
        %889 = vmatprep.subr.mxu0 0.0
        %890 = vmatpush1.msra.mxu0 0.0
        %891 = vmatprep.subr.mxu0 0.0
        %892 = vmatpush1.msra.mxu0 0.0
        %893 = vmatprep.subr.mxu0 0.0
        %894 = vmatpush1.msra.mxu0 0.0
        %895 = vmatprep.subr.mxu0 0.0
        %896 = vmatpush1.msra.mxu0 0.0
        %897 = vmatprep.subr.mxu0 0.0
        %898 = vmatpush1.msra.mxu0 0.0
        %899 = vmatprep.subr.mxu0 0.0
        %900 = vmatpush1.msra.mxu0 0.0
        %901 = vmatprep.subr.mxu0 0.0
        %902 = vmatpush1.msra.mxu0 0.0
        %903 = vmatprep.subr.mxu0 0.0
        %904 = vmatpush1.msra.mxu0 0.0
        %905 = vmatprep.subr.mxu0 0.0
        %906 = vmatpush1.msra.mxu0 0.0
        %907 = vmatprep.subr.mxu0 0.0
        %908 = vmatpush1.msra.mxu0 0.0
        %909 = vmatprep.subr.mxu0 0.0
        %910 = vmatpush1.msra.mxu0 0.0
        %911 = vmatprep.subr.mxu0 0.0
        %912 = vmatpush1.msra.mxu0 0.0
        %913 = vmatprep.subr.mxu0 0.0
        %914 = vmatpush1.msra.mxu0 0.0
        %915 = vmatprep.subr.mxu0 0.0
        %916 = vmatpush1.msra.mxu0 0.0
        %917 = vmatprep.subr.mxu0 0.0
        %918 = vmatpush1.msra.mxu0 0.0
        %919 = vmatprep.subr.mxu0 0.0
        %920 = vmatpush1.msra.mxu0 0.0
        %921 = vmatprep.subr.mxu0 0.0
        %922 = vmatpush1.msra.mxu0 0.0
        %923 = vmatprep.subr.mxu0 0.0
        %924 = vmatpush1.msra.mxu0 0.0
        %925 = vmatprep.mubr.f32.mxu0 0.0
        %926 = vmatmul.mubr.f32.gmra.mrb[0].mxu0 %v859
        %v927 = vpop.f32.mrb[0].mxu0
        %v928 = vadd.f32 %v693, %v927
        %v929 = vpop.f32.mrb[0].mxu0
        %930 = vdwg.mxu0
        %v931 = vmax.f32 %v928, 0.0
        %s932 = scalar_lea.vmem %s6, 32
        %v933 = vld [vmem:[%s932] sm:$0xff]
        %v934 = vld [vmem:[%s932 + $0x8] sm:$0xff]
        %v935 = vld [vmem:[%s932 + $0x10] sm:$0xff]
        %v936 = vld [vmem:[%s932 + $0x18] sm:$0xff]
        %v938 = vsel %vm685, %v931, 0
        %940 = vmatprep.subr.mxu0 0.0
        %941 = vmatpush1.msra.mxu0 %v933
        %942 = vmatprep.subr.mxu0 0.0
        %943 = vmatpush1.msra.mxu0 %v934
        %944 = vmatprep.subr.mxu0 0.0
        %945 = vmatpush1.msra.mxu0 %v935
        %946 = vmatprep.subr.mxu0 0.0
        %947 = vmatpush1.msra.mxu0 %v936
        %948 = vmatprep.subr.mxu0 0.0
        %949 = vmatpush1.msra.mxu0 0.0
        %950 = vmatprep.subr.mxu0 0.0
        %951 = vmatpush1.msra.mxu0 0.0
        %952 = vmatprep.subr.mxu0 0.0
        %953 = vmatpush1.msra.mxu0 0.0
        %954 = vmatprep.subr.mxu0 0.0
        %955 = vmatpush1.msra.mxu0 0.0
        %956 = vmatprep.subr.mxu0 0.0
        %957 = vmatpush1.msra.mxu0 0.0
        %958 = vmatprep.subr.mxu0 0.0
        %959 = vmatpush1.msra.mxu0 0.0
        %960 = vmatprep.subr.mxu0 0.0
        %961 = vmatpush1.msra.mxu0 0.0
        %962 = vmatprep.subr.mxu0 0.0
        %963 = vmatpush1.msra.mxu0 0.0
        %964 = vmatprep.subr.mxu0 0.0
        %965 = vmatpush1.msra.mxu0 0.0
        %966 = vmatprep.subr.mxu0 0.0
        %967 = vmatpush1.msra.mxu0 0.0
        %968 = vmatprep.subr.mxu0 0.0
        %969 = vmatpush1.msra.mxu0 0.0
        %970 = vmatprep.subr.mxu0 0.0
        %971 = vmatpush1.msra.mxu0 0.0
        %972 = vmatprep.subr.mxu0 0.0
        %973 = vmatpush1.msra.mxu0 0.0
        %974 = vmatprep.subr.mxu0 0.0
        %975 = vmatpush1.msra.mxu0 0.0
        %976 = vmatprep.subr.mxu0 0.0
        %977 = vmatpush1.msra.mxu0 0.0
        %978 = vmatprep.subr.mxu0 0.0
        %979 = vmatpush1.msra.mxu0 0.0
        %980 = vmatprep.subr.mxu0 0.0
        %981 = vmatpush1.msra.mxu0 0.0
        %982 = vmatprep.subr.mxu0 0.0
        %983 = vmatpush1.msra.mxu0 0.0
        %984 = vmatprep.subr.mxu0 0.0
        %985 = vmatpush1.msra.mxu0 0.0
        %986 = vmatprep.subr.mxu0 0.0
        %987 = vmatpush1.msra.mxu0 0.0
        %988 = vmatprep.subr.mxu0 0.0
        %989 = vmatpush1.msra.mxu0 0.0
        %990 = vmatprep.subr.mxu0 0.0
        %991 = vmatpush1.msra.mxu0 0.0
        %992 = vmatprep.subr.mxu0 0.0
        %993 = vmatpush1.msra.mxu0 0.0
        %994 = vmatprep.subr.mxu0 0.0
        %995 = vmatpush1.msra.mxu0 0.0
        %996 = vmatprep.subr.mxu0 0.0
        %997 = vmatpush1.msra.mxu0 0.0
        %998 = vmatprep.subr.mxu0 0.0
        %999 = vmatpush1.msra.mxu0 0.0
        %1000 = vmatprep.subr.mxu0 0.0
        %1001 = vmatpush1.msra.mxu0 0.0
        %1002 = vmatprep.subr.mxu0 0.0
        %1003 = vmatpush1.msra.mxu0 0.0
        %1004 = vmatprep.mubr.f32.mxu0 0.0
        %1005 = vmatmul.mubr.f32.gmra.mrb[0].mxu0 %v938
        %v1006 = vpop.f32.mrb[0].mxu0
        %v1007 = vadd.f32 0.0, %v1006
        %v1008 = vpop.f32.mrb[0].mxu0
        %1009 = vdwg.mxu0
        %v1010 = vadd.f32 %v847, %v1007
        %1012 = vrot.lane.b32.xlu0 %v535, 32
        %v1013 = vpop.permute.xlu0 %1012
        %1016 = vrot.lane.b32.xlu0 %v554, 64
        %v1017 = vpop.permute.xlu0 %1016
        %v1019 = vsel %vm685, %v516, %v1013
        %v1020 = vsel %vm687, %v1019, %v1017
        %v1022 = vsel %vm695, %v1020, 0
        %1024 = vmatprep.subr.mxu0 0.0
        %1025 = vmatpush1.msra.mxu0 %v581
        %1026 = vmatprep.subr.mxu0 0.0
        %1027 = vmatpush1.msra.mxu0 %v582
        %1028 = vmatprep.subr.mxu0 0.0
        %1029 = vmatpush1.msra.mxu0 %v583
        %1030 = vmatprep.subr.mxu0 0.0
        %1031 = vmatpush1.msra.mxu0 %v584
        %1032 = vmatprep.subr.mxu0 0.0
        %1033 = vmatpush1.msra.mxu0 %v585
        %1034 = vmatprep.subr.mxu0 0.0
        %1035 = vmatpush1.msra.mxu0 %v586
        %1036 = vmatprep.subr.mxu0 0.0
        %1037 = vmatpush1.msra.mxu0 %v587
        %1038 = vmatprep.subr.mxu0 0.0
        %1039 = vmatpush1.msra.mxu0 %v588
        %1040 = vmatprep.subr.mxu0 0.0
        %1041 = vmatpush1.msra.mxu0 %v589
        %1042 = vmatprep.subr.mxu0 0.0
        %1043 = vmatpush1.msra.mxu0 %v590
        %1044 = vmatprep.subr.mxu0 0.0
        %1045 = vmatpush1.msra.mxu0 %v591
        %1046 = vmatprep.subr.mxu0 0.0
        %1047 = vmatpush1.msra.mxu0 %v592
        %1048 = vmatprep.subr.mxu0 0.0
        %1049 = vmatpush1.msra.mxu0 0.0
        %1050 = vmatprep.subr.mxu0 0.0
        %1051 = vmatpush1.msra.mxu0 0.0
        %1052 = vmatprep.subr.mxu0 0.0
        %1053 = vmatpush1.msra.mxu0 0.0
        %1054 = vmatprep.subr.mxu0 0.0
        %1055 = vmatpush1.msra.mxu0 0.0
        %1056 = vmatprep.subr.mxu0 0.0
        %1057 = vmatpush1.msra.mxu0 0.0
        %1058 = vmatprep.subr.mxu0 0.0
        %1059 = vmatpush1.msra.mxu0 0.0
        %1060 = vmatprep.subr.mxu0 0.0
        %1061 = vmatpush1.msra.mxu0 0.0
        %1062 = vmatprep.subr.mxu0 0.0
        %1063 = vmatpush1.msra.mxu0 0.0
        %1064 = vmatprep.subr.mxu0 0.0
        %1065 = vmatpush1.msra.mxu0 0.0
        %1066 = vmatprep.subr.mxu0 0.0
        %1067 = vmatpush1.msra.mxu0 0.0
        %1068 = vmatprep.subr.mxu0 0.0
        %1069 = vmatpush1.msra.mxu0 0.0
        %1070 = vmatprep.subr.mxu0 0.0
        %1071 = vmatpush1.msra.mxu0 0.0
        %1072 = vmatprep.subr.mxu0 0.0
        %1073 = vmatpush1.msra.mxu0 0.0
        %1074 = vmatprep.subr.mxu0 0.0
        %1075 = vmatpush1.msra.mxu0 0.0
        %1076 = vmatprep.subr.mxu0 0.0
        %1077 = vmatpush1.msra.mxu0 0.0
        %1078 = vmatprep.subr.mxu0 0.0
        %1079 = vmatpush1.msra.mxu0 0.0
        %1080 = vmatprep.subr.mxu0 0.0
        %1081 = vmatpush1.msra.mxu0 0.0
        %1082 = vmatprep.subr.mxu0 0.0
        %1083 = vmatpush1.msra.mxu0 0.0
        %1084 = vmatprep.subr.mxu0 0.0
        %1085 = vmatpush1.msra.mxu0 0.0
        %1086 = vmatprep.subr.mxu0 0.0
        %1087 = vmatpush1.msra.mxu0 0.0
        %1088 = vmatprep.mubr.f32.mxu0 0.0
        %1089 = vmatmul.mubr.f32.gmra.mrb[0].mxu0 %v1022
        %v1090 = vpop.f32.mrb[0].mxu0
        %v1091 = vadd.f32 %v693, %v1090
        %v1092 = vpop.f32.mrb[0].mxu0
        %1093 = vdwg.mxu0
        %v1094 = vmax.f32 %v1091, 0.0
        %s1095 = scalar_lea.vmem %s6, 64
        %v1096 = vld [vmem:[%s1095] sm:$0xff]
        %v1097 = vld [vmem:[%s1095 + $0x8] sm:$0xff]
        %v1098 = vld [vmem:[%s1095 + $0x10] sm:$0xff]
        %v1099 = vld [vmem:[%s1095 + $0x18] sm:$0xff]
        %v1101 = vsel %vm685, %v1094, 0
        %1103 = vmatprep.subr.mxu0 0.0
        %1104 = vmatpush1.msra.mxu0 %v1096
        %1105 = vmatprep.subr.mxu0 0.0
        %1106 = vmatpush1.msra.mxu0 %v1097
        %1107 = vmatprep.subr.mxu0 0.0
        %1108 = vmatpush1.msra.mxu0 %v1098
        %1109 = vmatprep.subr.mxu0 0.0
        %1110 = vmatpush1.msra.mxu0 %v1099
        %1111 = vmatprep.subr.mxu0 0.0
        %1112 = vmatpush1.msra.mxu0 0.0
        %1113 = vmatprep.subr.mxu0 0.0
        %1114 = vmatpush1.msra.mxu0 0.0
        %1115 = vmatprep.subr.mxu0 0.0
        %1116 = vmatpush1.msra.mxu0 0.0
        %1117 = vmatprep.subr.mxu0 0.0
        %1118 = vmatpush1.msra.mxu0 0.0
        %1119 = vmatprep.subr.mxu0 0.0
        %1120 = vmatpush1.msra.mxu0 0.0
        %1121 = vmatprep.subr.mxu0 0.0
        %1122 = vmatpush1.msra.mxu0 0.0
        %1123 = vmatprep.subr.mxu0 0.0
        %1124 = vmatpush1.msra.mxu0 0.0
        %1125 = vmatprep.subr.mxu0 0.0
        %1126 = vmatpush1.msra.mxu0 0.0
        %1127 = vmatprep.subr.mxu0 0.0
        %1128 = vmatpush1.msra.mxu0 0.0
        %1129 = vmatprep.subr.mxu0 0.0
        %1130 = vmatpush1.msra.mxu0 0.0
        %1131 = vmatprep.subr.mxu0 0.0
        %1132 = vmatpush1.msra.mxu0 0.0
        %1133 = vmatprep.subr.mxu0 0.0
        %1134 = vmatpush1.msra.mxu0 0.0
        %1135 = vmatprep.subr.mxu0 0.0
        %1136 = vmatpush1.msra.mxu0 0.0
        %1137 = vmatprep.subr.mxu0 0.0
        %1138 = vmatpush1.msra.mxu0 0.0
        %1139 = vmatprep.subr.mxu0 0.0
        %1140 = vmatpush1.msra.mxu0 0.0
        %1141 = vmatprep.subr.mxu0 0.0
        %1142 = vmatpush1.msra.mxu0 0.0
        %1143 = vmatprep.subr.mxu0 0.0
        %1144 = vmatpush1.msra.mxu0 0.0
        %1145 = vmatprep.subr.mxu0 0.0
        %1146 = vmatpush1.msra.mxu0 0.0
        %1147 = vmatprep.subr.mxu0 0.0
        %1148 = vmatpush1.msra.mxu0 0.0
        %1149 = vmatprep.subr.mxu0 0.0
        %1150 = vmatpush1.msra.mxu0 0.0
        %1151 = vmatprep.subr.mxu0 0.0
        %1152 = vmatpush1.msra.mxu0 0.0
        %1153 = vmatprep.subr.mxu0 0.0
        %1154 = vmatpush1.msra.mxu0 0.0
        %1155 = vmatprep.subr.mxu0 0.0
        %1156 = vmatpush1.msra.mxu0 0.0
        %1157 = vmatprep.subr.mxu0 0.0
        %1158 = vmatpush1.msra.mxu0 0.0
        %1159 = vmatprep.subr.mxu0 0.0
        %1160 = vmatpush1.msra.mxu0 0.0
        %1161 = vmatprep.subr.mxu0 0.0
        %1162 = vmatpush1.msra.mxu0 0.0
        %1163 = vmatprep.subr.mxu0 0.0
        %1164 = vmatpush1.msra.mxu0 0.0
        %1165 = vmatprep.subr.mxu0 0.0
        %1166 = vmatpush1.msra.mxu0 0.0
        %1167 = vmatprep.mubr.f32.mxu0 0.0
        %1168 = vmatmul.mubr.f32.gmra.mrb[0].mxu0 %v1101
        %v1169 = vpop.f32.mrb[0].mxu0
        %v1170 = vadd.f32 0.0, %v1169
        %v1171 = vpop.f32.mrb[0].mxu0
        %1172 = vdwg.mxu0
        %v1173 = vadd.f32 %v1010, %v1170
        %1175 = vrot.lane.b32.xlu0 %v569, 32
        %v1176 = vpop.permute.xlu0 %1175
        %1179 = vrot.lane.b32.xlu0 %v580, 64
        %v1180 = vpop.permute.xlu0 %1179
        %v1182 = vsel %vm685, %v554, %v1176
        %v1183 = vsel %vm687, %v1182, %v1180
        %v1185 = vsel %vm695, %v1183, 0
        %1187 = vmatprep.subr.mxu0 0.0
        %1188 = vmatpush1.msra.mxu0 %v581
        %1189 = vmatprep.subr.mxu0 0.0
        %1190 = vmatpush1.msra.mxu0 %v582
        %1191 = vmatprep.subr.mxu0 0.0
        %1192 = vmatpush1.msra.mxu0 %v583
        %1193 = vmatprep.subr.mxu0 0.0
        %1194 = vmatpush1.msra.mxu0 %v584
        %1195 = vmatprep.subr.mxu0 0.0
        %1196 = vmatpush1.msra.mxu0 %v585
        %1197 = vmatprep.subr.mxu0 0.0
        %1198 = vmatpush1.msra.mxu0 %v586
        %1199 = vmatprep.subr.mxu0 0.0
        %1200 = vmatpush1.msra.mxu0 %v587
        %1201 = vmatprep.subr.mxu0 0.0
        %1202 = vmatpush1.msra.mxu0 %v588
        %1203 = vmatprep.subr.mxu0 0.0
        %1204 = vmatpush1.msra.mxu0 %v589
        %1205 = vmatprep.subr.mxu0 0.0
        %1206 = vmatpush1.msra.mxu0 %v590
        %1207 = vmatprep.subr.mxu0 0.0
        %1208 = vmatpush1.msra.mxu0 %v591
        %1209 = vmatprep.subr.mxu0 0.0
        %1210 = vmatpush1.msra.mxu0 %v592
        %1211 = vmatprep.subr.mxu0 0.0
        %1212 = vmatpush1.msra.mxu0 0.0
        %1213 = vmatprep.subr.mxu0 0.0
        %1214 = vmatpush1.msra.mxu0 0.0
        %1215 = vmatprep.subr.mxu0 0.0
        %1216 = vmatpush1.msra.mxu0 0.0
        %1217 = vmatprep.subr.mxu0 0.0
        %1218 = vmatpush1.msra.mxu0 0.0
        %1219 = vmatprep.subr.mxu0 0.0
        %1220 = vmatpush1.msra.mxu0 0.0
        %1221 = vmatprep.subr.mxu0 0.0
        %1222 = vmatpush1.msra.mxu0 0.0
        %1223 = vmatprep.subr.mxu0 0.0
        %1224 = vmatpush1.msra.mxu0 0.0
        %1225 = vmatprep.subr.mxu0 0.0
        %1226 = vmatpush1.msra.mxu0 0.0
        %1227 = vmatprep.subr.mxu0 0.0
        %1228 = vmatpush1.msra.mxu0 0.0
        %1229 = vmatprep.subr.mxu0 0.0
        %1230 = vmatpush1.msra.mxu0 0.0
        %1231 = vmatprep.subr.mxu0 0.0
        %1232 = vmatpush1.msra.mxu0 0.0
        %1233 = vmatprep.subr.mxu0 0.0
        %1234 = vmatpush1.msra.mxu0 0.0
        %1235 = vmatprep.subr.mxu0 0.0
        %1236 = vmatpush1.msra.mxu0 0.0
        %1237 = vmatprep.subr.mxu0 0.0
        %1238 = vmatpush1.msra.mxu0 0.0
        %1239 = vmatprep.subr.mxu0 0.0
        %1240 = vmatpush1.msra.mxu0 0.0
        %1241 = vmatprep.subr.mxu0 0.0
        %1242 = vmatpush1.msra.mxu0 0.0
        %1243 = vmatprep.subr.mxu0 0.0
        %1244 = vmatpush1.msra.mxu0 0.0
        %1245 = vmatprep.subr.mxu0 0.0
        %1246 = vmatpush1.msra.mxu0 0.0
        %1247 = vmatprep.subr.mxu0 0.0
        %1248 = vmatpush1.msra.mxu0 0.0
        %1249 = vmatprep.subr.mxu0 0.0
        %1250 = vmatpush1.msra.mxu0 0.0
        %1251 = vmatprep.mubr.f32.mxu0 0.0
        %1252 = vmatmul.mubr.f32.gmra.mrb[0].mxu0 %v1185
        %v1253 = vpop.f32.mrb[0].mxu0
        %v1254 = vadd.f32 %v693, %v1253
        %v1255 = vpop.f32.mrb[0].mxu0
        %1256 = vdwg.mxu0
        %v1257 = vmax.f32 %v1254, 0.0
        %s1258 = scalar_lea.vmem %s6, 96
        %v1259 = vld [vmem:[%s1258] sm:$0xff]
        %v1260 = vld [vmem:[%s1258 + $0x8] sm:$0xff]
        %v1261 = vld [vmem:[%s1258 + $0x10] sm:$0xff]
        %v1262 = vld [vmem:[%s1258 + $0x18] sm:$0xff]
        %v1264 = vsel %vm685, %v1257, 0
        %1266 = vmatprep.subr.mxu0 0.0
        %1267 = vmatpush1.msra.mxu0 %v1259
        %1268 = vmatprep.subr.mxu0 0.0
        %1269 = vmatpush1.msra.mxu0 %v1260
        %1270 = vmatprep.subr.mxu0 0.0
        %1271 = vmatpush1.msra.mxu0 %v1261
        %1272 = vmatprep.subr.mxu0 0.0
        %1273 = vmatpush1.msra.mxu0 %v1262
        %1274 = vmatprep.subr.mxu0 0.0
        %1275 = vmatpush1.msra.mxu0 0.0
        %1276 = vmatprep.subr.mxu0 0.0
        %1277 = vmatpush1.msra.mxu0 0.0
        %1278 = vmatprep.subr.mxu0 0.0
        %1279 = vmatpush1.msra.mxu0 0.0
        %1280 = vmatprep.subr.mxu0 0.0
        %1281 = vmatpush1.msra.mxu0 0.0
        %1282 = vmatprep.subr.mxu0 0.0
        %1283 = vmatpush1.msra.mxu0 0.0
        %1284 = vmatprep.subr.mxu0 0.0
        %1285 = vmatpush1.msra.mxu0 0.0
        %1286 = vmatprep.subr.mxu0 0.0
        %1287 = vmatpush1.msra.mxu0 0.0
        %1288 = vmatprep.subr.mxu0 0.0
        %1289 = vmatpush1.msra.mxu0 0.0
        %1290 = vmatprep.subr.mxu0 0.0
        %1291 = vmatpush1.msra.mxu0 0.0
        %1292 = vmatprep.subr.mxu0 0.0
        %1293 = vmatpush1.msra.mxu0 0.0
        %1294 = vmatprep.subr.mxu0 0.0
        %1295 = vmatpush1.msra.mxu0 0.0
        %1296 = vmatprep.subr.mxu0 0.0
        %1297 = vmatpush1.msra.mxu0 0.0
        %1298 = vmatprep.subr.mxu0 0.0
        %1299 = vmatpush1.msra.mxu0 0.0
        %1300 = vmatprep.subr.mxu0 0.0
        %1301 = vmatpush1.msra.mxu0 0.0
        %1302 = vmatprep.subr.mxu0 0.0
        %1303 = vmatpush1.msra.mxu0 0.0
        %1304 = vmatprep.subr.mxu0 0.0
        %1305 = vmatpush1.msra.mxu0 0.0
        %1306 = vmatprep.subr.mxu0 0.0
        %1307 = vmatpush1.msra.mxu0 0.0
        %1308 = vmatprep.subr.mxu0 0.0
        %1309 = vmatpush1.msra.mxu0 0.0
        %1310 = vmatprep.subr.mxu0 0.0
        %1311 = vmatpush1.msra.mxu0 0.0
        %1312 = vmatprep.subr.mxu0 0.0
        %1313 = vmatpush1.msra.mxu0 0.0
        %1314 = vmatprep.subr.mxu0 0.0
        %1315 = vmatpush1.msra.mxu0 0.0
        %1316 = vmatprep.subr.mxu0 0.0
        %1317 = vmatpush1.msra.mxu0 0.0
        %1318 = vmatprep.subr.mxu0 0.0
        %1319 = vmatpush1.msra.mxu0 0.0
        %1320 = vmatprep.subr.mxu0 0.0
        %1321 = vmatpush1.msra.mxu0 0.0
        %1322 = vmatprep.subr.mxu0 0.0
        %1323 = vmatpush1.msra.mxu0 0.0
        %1324 = vmatprep.subr.mxu0 0.0
        %1325 = vmatpush1.msra.mxu0 0.0
        %1326 = vmatprep.subr.mxu0 0.0
        %1327 = vmatpush1.msra.mxu0 0.0
        %1328 = vmatprep.subr.mxu0 0.0
        %1329 = vmatpush1.msra.mxu0 0.0
        %1330 = vmatprep.mubr.f32.mxu0 0.0
        %1331 = vmatmul.mubr.f32.gmra.mrb[0].mxu0 %v1264
        %v1332 = vpop.f32.mrb[0].mxu0
        %v1333 = vadd.f32 0.0, %v1332
        %v1334 = vpop.f32.mrb[0].mxu0
        %1335 = vdwg.mxu0
        %v1336 = vadd.f32 %v1173, %v1333
        %v1337 = vmax.f32 %v1336, 0.0
        %v1338 = vld [vmem:[%s9] sm:$0xff]
        %v1339 = vld [vmem:[%s9 + $0x8] sm:$0xff]
        %v1340 = vld [vmem:[%s9 + $0x10] sm:$0xff]
        %v1341 = vld [vmem:[%s9 + $0x18] sm:$0xff]
        %v1342 = vld [vmem:[%s9 + $0x20] sm:$0xff]
        %v1343 = vld [vmem:[%s9 + $0x28] sm:$0xff]
        %v1344 = vld [vmem:[%s9 + $0x30] sm:$0xff]
        %v1345 = vld [vmem:[%s9 + $0x38] sm:$0xff]
        %v1346 = vld [vmem:[%s10] sm:$0x1]
        %v1348 = vlaneseq
        %v1349 = vshrl.u32 %v1348, 7
        %v1350 = vsub.s32 0, %v1349
        %v1351 = vrot.slane %v1346, %v1350
        %v1354 = vsel %vm687, %v1337, 0
        %1356 = vmatprep.subr.mxu0 0.0
        %1357 = vmatpush1.msra.mxu0 %v1338
        %1358 = vmatprep.subr.mxu0 0.0
        %1359 = vmatpush1.msra.mxu0 %v1339
        %1360 = vmatprep.subr.mxu0 0.0
        %1361 = vmatpush1.msra.mxu0 %v1340
        %1362 = vmatprep.subr.mxu0 0.0
        %1363 = vmatpush1.msra.mxu0 %v1341
        %1364 = vmatprep.subr.mxu0 0.0
        %1365 = vmatpush1.msra.mxu0 %v1342
        %1366 = vmatprep.subr.mxu0 0.0
        %1367 = vmatpush1.msra.mxu0 %v1343
        %1368 = vmatprep.subr.mxu0 0.0
        %1369 = vmatpush1.msra.mxu0 %v1344
        %1370 = vmatprep.subr.mxu0 0.0
        %1371 = vmatpush1.msra.mxu0 %v1345
        %1372 = vmatprep.subr.mxu0 0.0
        %1373 = vmatpush1.msra.mxu0 0.0
        %1374 = vmatprep.subr.mxu0 0.0
        %1375 = vmatpush1.msra.mxu0 0.0
        %1376 = vmatprep.subr.mxu0 0.0
        %1377 = vmatpush1.msra.mxu0 0.0
        %1378 = vmatprep.subr.mxu0 0.0
        %1379 = vmatpush1.msra.mxu0 0.0
        %1380 = vmatprep.subr.mxu0 0.0
        %1381 = vmatpush1.msra.mxu0 0.0
        %1382 = vmatprep.subr.mxu0 0.0
        %1383 = vmatpush1.msra.mxu0 0.0
        %1384 = vmatprep.subr.mxu0 0.0
        %1385 = vmatpush1.msra.mxu0 0.0
        %1386 = vmatprep.subr.mxu0 0.0
        %1387 = vmatpush1.msra.mxu0 0.0
        %1388 = vmatprep.subr.mxu0 0.0
        %1389 = vmatpush1.msra.mxu0 0.0
        %1390 = vmatprep.subr.mxu0 0.0
        %1391 = vmatpush1.msra.mxu0 0.0
        %1392 = vmatprep.subr.mxu0 0.0
        %1393 = vmatpush1.msra.mxu0 0.0
        %1394 = vmatprep.subr.mxu0 0.0
        %1395 = vmatpush1.msra.mxu0 0.0
        %1396 = vmatprep.subr.mxu0 0.0
        %1397 = vmatpush1.msra.mxu0 0.0
        %1398 = vmatprep.subr.mxu0 0.0
        %1399 = vmatpush1.msra.mxu0 0.0
        %1400 = vmatprep.subr.mxu0 0.0
        %1401 = vmatpush1.msra.mxu0 0.0
        %1402 = vmatprep.subr.mxu0 0.0
        %1403 = vmatpush1.msra.mxu0 0.0
        %1404 = vmatprep.subr.mxu0 0.0
        %1405 = vmatpush1.msra.mxu0 0.0
        %1406 = vmatprep.subr.mxu0 0.0
        %1407 = vmatpush1.msra.mxu0 0.0
        %1408 = vmatprep.subr.mxu0 0.0
        %1409 = vmatpush1.msra.mxu0 0.0
        %1410 = vmatprep.subr.mxu0 0.0
        %1411 = vmatpush1.msra.mxu0 0.0
        %1412 = vmatprep.subr.mxu0 0.0
        %1413 = vmatpush1.msra.mxu0 0.0
        %1414 = vmatprep.subr.mxu0 0.0
        %1415 = vmatpush1.msra.mxu0 0.0
        %1416 = vmatprep.subr.mxu0 0.0
        %1417 = vmatpush1.msra.mxu0 0.0
        %1418 = vmatprep.subr.mxu0 0.0
        %1419 = vmatpush1.msra.mxu0 0.0
        %1420 = vmatprep.mubr.f32.mxu0 0.0
        %1421 = vmatmul.mubr.f32.gmra.mrb[0].mxu0 %v1354
        %v1422 = vpop.f32.mrb[0].mxu0
        %v1423 = vadd.f32 %v1351, %v1422
        %v1424 = vpop.f32.mrb[0].mxu0
        %1425 = vdwg.mxu0
        %1426 = vst.msk [vmem:[%s390] sm:$0xff] %vm685, %v1423
        %s1427 = sand.u32 %s274, 1
        %s1428 = scalar_lea.sflag [#allocation3], %s1427
        %s1429 = sand.u32 %s274, 1
        %s1430 = smul.addr %s1429, 8
        %s1431 = scalar_lea.vmem [#allocation2], %s1430
        // Predicated region
        $region65: #{cnn_model_forward.1} parent=63 // pred_check
          %p1432 = pneg %p284
        $region66: #{cnn_model_forward.1} parent=63 // pred_check_branch
          %1434 = sbr.rel (%p1432) target = $region68
        $region67: #{cnn_model_forward.1} parent=63 // pred_region
          %s1436 = ssub.s32 128, 128
          %1437 = vsyncadd %s1428, %s1436
          %s1438 = smul.addr %s25, 128
          %s1439 = scalar_lea.hbm %s11, %s1438
          %s1441 = sshll.u32 %s1431, 4
          %s1442 = int_to_ptr.vmem [resolvable:$true] %s1441
          %1444 = dma.vmem_to_hbm [thread:$0]  %s1442, 128, %s1439, %s1428
        $region68: #{cnn_model_forward.1} parent=63 // pred_fallthru
          _
      $region64: #{cnn_model_forward.1} parent=5 // pred_fallthru
        _
      %p1445 = scmp.le.s32.totalorder 2, %s20
      // Predicated region
      $region69: #{cnn_model_forward.1} parent=5 // pred_check
        %p1446 = pneg %p1445
      $region70: #{cnn_model_forward.1} parent=5 // pred_check_branch
        %1448 = sbr.rel (%p1446) target = $region72
      $region71: #{cnn_model_forward.1} parent=5 // pred_region
        %s1449 = ssub.s32 %s20, 2
        // Predicated region
        $region73: #{cnn_model_forward.1} parent=71 // pred_check
          %p1450 = pneg %p290
        $region74: #{cnn_model_forward.1} parent=71 // pred_check_branch
          %1452 = sbr.rel (%p1450) target = $region76
        $region75: #{cnn_model_forward.1} parent=71 // pred_region
          %s1453 = sand.u32 %s275, 1
          %s1454 = scalar_lea.sflag [#allocation3], %s1453
          %s1455 = sand.u32 %s275, 1
          %s1456 = smul.addr %s1455, 8
          %s1457 = scalar_lea.vmem [#allocation2], %s1456
          %1458 = dma.done %s1454, 128
        $region76: #{cnn_model_forward.1} parent=71 // pred_fallthru
          _
      $region72: #{cnn_model_forward.1} parent=5 // pred_fallthru
        _
    $region6: #{cnn_model_forward.1} parent=1 // loop_footer
      %s24 = sadd.s32 1, %s20
    $region7: #{cnn_model_forward.1} parent=1 // loop_footer_branch
      %19 = sbr.rel target = $region3
    $region8: #{cnn_model_forward.1} parent=1 // loop_exit
      _
    %1459 = vsyncpa [#allocation3], 1
    %s1460 = scalar_lea.sflag [#allocation3], 1
    %1461 = vsyncpa %s1460, 1

</llo_original>
